<compile_context>
chip_gen: v5e
topology: v5e:2x2
jax: 0.10.0
libtpu: 0.0.40
codegen_flags: <defaults>
</compile_context>

<pallas_src>
import math

import jax
import jax.numpy as jnp
from jax.experimental import pallas as pl
from jax.experimental.pallas import tpu as pltpu


# --------------------------------------------------------------------------- #
# Kernel: Image2TextGate + text gating, fused, grid = (batch blocks, seq blocks)
# --------------------------------------------------------------------------- #
def _tfs_kernel(ir_ref, ii_ref, sr_ref, si_ref, wt_ref, b_ref, t_ref,
                out_ref, gate_ref):
    # Gate is computed only on the first sequence tile of each batch block and
    # persists in VMEM scratch across the (inner, "arbitrary") sequence axis.
    @pl.when(pl.program_id(1) == 0)
    def _():
        # real(image * select_para) summed over the N tokens.
        # (AvgPool's 1/N is folded into the conv weight in the wrapper.)
        pooled = (jnp.sum(ir_ref[...] * sr_ref[...], axis=1)
                  - jnp.sum(ii_ref[...] * si_ref[...], axis=1))          # (Bt, D) f32
        # Conv1d(k=1) == channel matmul on the MXU.  wt is pre-transposed AND
        # column-duplicated in the wrapper, so the result is already in the
        # interleaved [g0, g0, g1, g1, ...] layout -> no in-kernel repeat/reshape.
        gate_ref[...] = (jnp.dot(pooled.astype(wt_ref.dtype), wt_ref[...],
                                 preferred_element_type=jnp.float32)
                         + b_ref[...])                                   # (Bt, 2D) f32

    # Gate the interleaved text tile: plain lane-wise multiply, lane-dense store.
    g = gate_ref[...][:, None, :]                                        # (Bt, 1, 2D)
    out_ref[...] = (t_ref[...].astype(jnp.float32) * g).astype(out_ref.dtype)


# --------------------------------------------------------------------------- #
# Small helpers
# --------------------------------------------------------------------------- #
def _vmem_limit_bytes():
    """Raise the scoped-VMEM limit toward physical capacity (review: v5e/v6e default
    to 16/32 MiB of 128 MiB).  Stays <= 75% of capacity so it is also valid on v7x."""
    try:
        cap = pltpu.get_tpu_info().vmem_capacity_bytes
        return int(min(cap * 3 // 4, 96 * 1024 * 1024))
    except Exception:
        return 48 * 1024 * 1024


def _largest_block(extent, target, multiple):
    """Largest divisor of `extent` that is <= target and a multiple of `multiple`;
    falls back to the full extent (always a legal block dim)."""
    if extent <= target:
        return extent
    best = 0
    cand = multiple
    while cand <= target:
        if extent % cand == 0:
            best = cand
        cand += multiple
    return best if best > 0 else extent


# --------------------------------------------------------------------------- #
# Production entry point: interleaved text I/O (== complex64 memory layout)
# --------------------------------------------------------------------------- #
def text_frequency_selection_interleaved(text_il, image, params, *,
                                         block_b=None, block_s=None):
    """text_il: (B, S, 2*D) float32 or bfloat16, interleaved [re0, im0, re1, im1, ...].
    image: (B, N, D) complex64.  Returns the gated text in the same interleaved
    layout and dtype as `text_il`."""
    B, N, D = image.shape
    Bt_, S, DD = text_il.shape
    assert Bt_ == B and DD == 2 * D
    # 2*D % 128 == 0 keeps every output store an unmasked full-lane vst.
    assert D % 64 == 0, "d_model must be a multiple of 64 (pad if necessary)"

    f32 = jnp.float32
    io_dtype = text_il.dtype
    itemsize = jnp.dtype(io_dtype).itemsize

    # Gate-path operands are image-sized (cheap): split real/imag in the wrapper.
    ir = jnp.real(image).astype(f32)
    ii = jnp.imag(image).astype(f32)
    sr = jnp.real(params["select_para"]).astype(f32)
    si = jnp.imag(params["select_para"]).astype(f32)

    # Conv1d(k=1) weight: transpose to (in, out), fold in the AvgPool 1/N, and
    # duplicate every output column so the matmul emits the gate directly in the
    # interleaved [g0, g0, g1, g1, ...] layout.
    wt = params["conv_w"].astype(f32).T * (1.0 / N)                 # (in, out)
    wt_il = jnp.repeat(wt, 2, axis=1)                               # (D, 2D)
    b_il = jnp.repeat(params["conv_b"].astype(f32).reshape(-1), 2).reshape(1, 2 * D)
    # bf16 is the native MXU input dtype on v6e/v7x; the gate FLOPs are negligible,
    # so only bother when D is large.  Accumulation stays f32.
    dot_dtype = jnp.bfloat16 if D >= 512 else f32
    wt_il = wt_il.astype(dot_dtype)

    vmem_limit = _vmem_limit_bytes()

    # ---- block sizing ------------------------------------------------------ #
    if block_b is None:
        # >=2 batch blocks lets the "parallel" axis feed both v7x TensorCores.
        # On single-TC v5e/v6e the extra grid steps cost ~0.35us each (negligible);
        # callers there can pass block_b=B to remove them entirely.
        block_b = B // 2 if (B % 2 == 0 and B >= 2) else B
    assert B % block_b == 0

    if block_s is None:
        # Per step we hold one text tile + one out tile, each double-buffered:
        #   4 * block_b * block_s * 2D * itemsize bytes.
        # Keep that under ~half the scoped-VMEM budget (params/image/scratch + headroom).
        row_bytes = block_b * 2 * D * itemsize
        target = max(8, (vmem_limit // 2) // (4 * row_bytes))
        sub = 16 if itemsize == 2 else 8            # bf16 packs 2 rows per sublane
        block_s = _largest_block(S, int(target), sub)
    assert S % block_s == 0

    grid = (B // block_b, S // block_s)

    def _run(single_buffer_params):
        # Single-buffer the grid-invariant params to halve their VMEM footprint.
        inv_kw = dict(pipeline_mode=pl.Buffered(1)) if single_buffer_params else {}
        in_specs = [
            # image real / imag: change with the batch block only (constant in seq)
            pl.BlockSpec((block_b, N, D), lambda bb, ss: (bb, 0, 0)),
            pl.BlockSpec((block_b, N, D), lambda bb, ss: (bb, 0, 0)),
            # grid-invariant params
            pl.BlockSpec((N, D), lambda bb, ss: (0, 0), **inv_kw),
            pl.BlockSpec((N, D), lambda bb, ss: (0, 0), **inv_kw),
            pl.BlockSpec((D, 2 * D), lambda bb, ss: (0, 0), **inv_kw),
            pl.BlockSpec((1, 2 * D), lambda bb, ss: (0, 0), **inv_kw),
            # interleaved text: tiled over batch and sequence
            pl.BlockSpec((block_b, block_s, 2 * D), lambda bb, ss: (bb, ss, 0)),
        ]
        out_spec = pl.BlockSpec((block_b, block_s, 2 * D), lambda bb, ss: (bb, ss, 0))
        return pl.pallas_call(
            _tfs_kernel,
            grid=grid,
            in_specs=in_specs,
            out_specs=out_spec,
            out_shape=jax.ShapeDtypeStruct((B, S, 2 * D), io_dtype),
            scratch_shapes=[pltpu.VMEM((block_b, 2 * D), f32)],  # gate, persists over seq axis
            compiler_params=pltpu.CompilerParams(
                dimension_semantics=("parallel", "arbitrary"),
                vmem_limit_bytes=vmem_limit),
        )(ir, ii, sr, si, wt_il, b_il, text_il)

    try:
        return _run(True)
    except Exception:
        # pl.Buffered(1) rejected by this jax build -> fall back to default buffering.
        return _run(False)


# --------------------------------------------------------------------------- #
# complex64 convenience wrapper (matches the PyTorch module interface)
# --------------------------------------------------------------------------- #
def text_frequency_selection(text, image, params, **kwargs):
    # TODO(synk): lax.bitcast_convert_type rejects complex dtypes, so this
    # complex64 <-> interleaved-f32 conversion costs one XLA pass over text each
    # way; keep text interleaved and use text_frequency_selection_interleaved in
    # production to avoid it.
    B, S, D = text.shape
    text_il = jnp.stack([jnp.real(text), jnp.imag(text)], axis=-1)
    text_il = text_il.reshape(B, S, 2 * D).astype(jnp.float32)
    out_il = text_frequency_selection_interleaved(text_il, image, params, **kwargs)
    out = out_il.astype(jnp.float32).reshape(B, S, D, 2)
    return jax.lax.complex(out[..., 0], out[..., 1])


# --------------------------------------------------------------------------- #
# Pure-JAX reference (for the sanity check)
# --------------------------------------------------------------------------- #
def text_frequency_selection_ref(text, image, params):
    gr = jnp.real(image * params["select_para"][None])            # (B, N, D)
    pooled = jnp.mean(gr, axis=1)                                 # (B, D)
    gate = pooled @ params["conv_w"].T + params["conv_b"]         # (B, D)
    return text * gate[:, None, :]                                # complex * real


# --------------------------------------------------------------------------- #
if __name__ == "__main__":
    B, S, N, D = 4, 8, 16, 128      # batch, text seq, image tokens, d_model

    key = jax.random.PRNGKey(0)
    ks = jax.random.split(key, 8)
    rn = lambda k, shape: jax.random.normal(k, shape, jnp.float32)

    tr, ti = rn(ks[0], (B, S, D)), rn(ks[1], (B, S, D))
    ir, ii = rn(ks[2], (B, N, D)), rn(ks[3], (B, N, D))
    image = jax.lax.complex(ir, ii)
    params = {
        "select_para": jax.lax.complex(rn(ks[4], (N, D)), rn(ks[5], (N, D))),
        "conv_w": rn(ks[6], (D, D)) * (1.0 / math.sqrt(D)),   # Conv1d(k=1) weight (out, in)
        "conv_b": rn(ks[7], (D,)) * 0.02,
    }

    # Production path: text already in the interleaved layout (== complex64 memory).
    text_il = jnp.stack([tr, ti], axis=-1).reshape(B, S, 2 * D)

    out_il = text_frequency_selection_interleaved(text_il, image, params)
    jax.block_until_ready(out_il)
    assert out_il.shape == (B, S, 2 * D) and out_il.dtype == jnp.float32

    # Check against the pure-JAX complex reference.
    out = out_il.reshape(B, S, D, 2)
    out_c = jax.lax.complex(out[..., 0], out[..., 1])
    ref = text_frequency_selection_ref(jax.lax.complex(tr, ti), image, params)
    max_err = float(jnp.max(jnp.abs(out_c - ref)))
    assert jnp.allclose(out_c, ref, rtol=2e-2, atol=2e-2), f"max abs err = {max_err}"

    print("KERNEL_OK")
</pallas_src>

<mosaic_0001>
module attributes {stable_mosaic.version = 11 : i64} {
  func.func @_tfs_kernel(%arg0: i32, %arg1: i32, %arg2: memref<2x16x128xf32, #tpu.memory_space<vmem>>, %arg3: memref<2x16x128xf32, #tpu.memory_space<vmem>>, %arg4: memref<16x128xf32, #tpu.memory_space<vmem>>, %arg5: memref<16x128xf32, #tpu.memory_space<vmem>>, %arg6: memref<128x256xf32, #tpu.memory_space<vmem>>, %arg7: memref<1x256xf32, #tpu.memory_space<vmem>>, %arg8: memref<2x8x256xf32, #tpu.memory_space<vmem>>, %arg9: memref<2x8x256xf32, #tpu.memory_space<vmem>>, %arg10: memref<2x256xf32, #tpu.memory_space<vmem>>) attributes {dimension_semantics = [#tpu.dimension_semantics<parallel>, #tpu.dimension_semantics<arbitrary>], iteration_bounds = array<i64: 2, 1>, scalar_prefetch = 0 : i64, scratch_operands = 1 : i64, tpu.core_type = #tpu.core_type<tc>, window_params = [{transform_indices = @transform_0, window_bounds = array<i64: 2, 16, 128>}, {transform_indices = @transform_1, window_bounds = array<i64: 2, 16, 128>}, {pipeline_mode = #tpu.pipeline_mode<synchronous>, transform_indices = @transform_2, window_bounds = array<i64: 16, 128>}, {pipeline_mode = #tpu.pipeline_mode<synchronous>, transform_indices = @transform_3, window_bounds = array<i64: 16, 128>}, {pipeline_mode = #tpu.pipeline_mode<synchronous>, transform_indices = @transform_4, window_bounds = array<i64: 128, 256>}, {pipeline_mode = #tpu.pipeline_mode<synchronous>, transform_indices = @transform_5, window_bounds = array<i64: 1, 256>}, {transform_indices = @transform_6, window_bounds = array<i64: 2, 8, 256>}, {transform_indices = @transform_7, window_bounds = array<i64: 2, 8, 256>}]} {
    %c0_i32 = arith.constant 0 : i32
    %0 = arith.cmpi eq, %arg1, %c0_i32 : i32
    %1 = arith.extui %0 : i1 to i32
    %c0_i32_0 = arith.constant 0 : i32
    %2 = arith.cmpi ne, %1, %c0_i32_0 : i32
    scf.if %2 {
      %c0_8 = arith.constant 0 : index
      %c0_9 = arith.constant 0 : index
      %c0_10 = arith.constant 0 : index
      %9 = vector.load %arg2[%c0_8, %c0_9, %c0_10] : memref<2x16x128xf32, #tpu.memory_space<vmem>>, vector<2x16x128xf32>
      %c0_11 = arith.constant 0 : index
      %c0_12 = arith.constant 0 : index
      %10 = vector.load %arg4[%c0_11, %c0_12] : memref<16x128xf32, #tpu.memory_space<vmem>>, vector<16x128xf32>
      %11 = vector.shape_cast %10 : vector<16x128xf32> to vector<1x16x128xf32>
      %12 = vector.broadcast %11 : vector<1x16x128xf32> to vector<2x16x128xf32>
      %13 = arith.mulf %9, %12 : vector<2x16x128xf32>
      %cst = arith.constant dense<0.000000e+00> : vector<2x128xf32>
      %14 = vector.multi_reduction <add>, %13, %cst [1] : vector<2x16x128xf32> to vector<2x128xf32>
      %c0_13 = arith.constant 0 : index
      %c0_14 = arith.constant 0 : index
      %c0_15 = arith.constant 0 : index
      %15 = vector.load %arg3[%c0_13, %c0_14, %c0_15] : memref<2x16x128xf32, #tpu.memory_space<vmem>>, vector<2x16x128xf32>
      %c0_16 = arith.constant 0 : index
      %c0_17 = arith.constant 0 : index
      %16 = vector.load %arg5[%c0_16, %c0_17] : memref<16x128xf32, #tpu.memory_space<vmem>>, vector<16x128xf32>
      %17 = vector.shape_cast %16 : vector<16x128xf32> to vector<1x16x128xf32>
      %18 = vector.broadcast %17 : vector<1x16x128xf32> to vector<2x16x128xf32>
      %19 = arith.mulf %15, %18 : vector<2x16x128xf32>
      %cst_18 = arith.constant dense<0.000000e+00> : vector<2x128xf32>
      %20 = vector.multi_reduction <add>, %19, %cst_18 [1] : vector<2x16x128xf32> to vector<2x128xf32>
      %21 = arith.subf %14, %20 : vector<2x128xf32>
      %c0_19 = arith.constant 0 : index
      %c0_20 = arith.constant 0 : index
      %22 = vector.load %arg6[%c0_19, %c0_20] : memref<128x256xf32, #tpu.memory_space<vmem>>, vector<128x256xf32>
      %cst_21 = arith.constant dense<0.000000e+00> : vector<2x256xf32>
      %23 = tpu.matmul %21, %22, %cst_21 {dimension_numbers = #tpu.dot_dimension_numbers<[1], [0], [0], [1], [0, 0, 1, 1], [], []>} : vector<2x128xf32>, vector<128x256xf32>, vector<2x256xf32> -> vector<2x256xf32>
      %c0_22 = arith.constant 0 : index
      %c0_23 = arith.constant 0 : index
      %24 = vector.load %arg7[%c0_22, %c0_23] : memref<1x256xf32, #tpu.memory_space<vmem>>, vector<1x256xf32>
      %25 = vector.broadcast %24 : vector<1x256xf32> to vector<2x256xf32>
      %26 = arith.addf %23, %25 : vector<2x256xf32>
      %c0_24 = arith.constant 0 : index
      %c0_25 = arith.constant 0 : index
      %27 = vector.load %arg10[%c0_24, %c0_25] : memref<2x256xf32, #tpu.memory_space<vmem>>, vector<2x256xf32>
      tpu.vector_store %arg10[%c0_24, %c0_25], %26 {strides = array<i32>} : memref<2x256xf32, #tpu.memory_space<vmem>>, vector<2x256xf32>,
    } else {
    }
    %c0 = arith.constant 0 : index
    %c0_1 = arith.constant 0 : index
    %3 = vector.load %arg10[%c0, %c0_1] : memref<2x256xf32, #tpu.memory_space<vmem>>, vector<2x256xf32>
    %4 = vector.shape_cast %3 : vector<2x256xf32> to vector<2x1x256xf32>
    %c0_2 = arith.constant 0 : index
    %c0_3 = arith.constant 0 : index
    %c0_4 = arith.constant 0 : index
    %5 = vector.load %arg8[%c0_2, %c0_3, %c0_4] : memref<2x8x256xf32, #tpu.memory_space<vmem>>, vector<2x8x256xf32>
    %6 = vector.broadcast %4 : vector<2x1x256xf32> to vector<2x8x256xf32>
    %7 = arith.mulf %5, %6 : vector<2x8x256xf32>
    %c0_5 = arith.constant 0 : index
    %c0_6 = arith.constant 0 : index
    %c0_7 = arith.constant 0 : index
    %8 = vector.load %arg9[%c0_5, %c0_6, %c0_7] : memref<2x8x256xf32, #tpu.memory_space<vmem>>, vector<2x8x256xf32>
    tpu.vector_store %arg9[%c0_5, %c0_6, %c0_7], %7 {strides = array<i32>} : memref<2x8x256xf32, #tpu.memory_space<vmem>>, vector<2x8x256xf32>,
    return
  }
  func.func @transform_0(%arg0: i32, %arg1: i32) -> (i32, i32, i32) {
    %c0_i32 = arith.constant 0 : i32
    %c0_i32_0 = arith.constant 0 : i32
    %c0_i32_1 = arith.constant 0 : i32
    return %arg0, %c0_i32, %c0_i32_0 : i32, i32, i32
  }
  func.func @transform_1(%arg0: i32, %arg1: i32) -> (i32, i32, i32) {
    %c0_i32 = arith.constant 0 : i32
    %c0_i32_0 = arith.constant 0 : i32
    %c0_i32_1 = arith.constant 0 : i32
    return %arg0, %c0_i32, %c0_i32_0 : i32, i32, i32
  }
  func.func @transform_2(%arg0: i32, %arg1: i32) -> (i32, i32) {
    %c0_i32 = arith.constant 0 : i32
    %c0_i32_0 = arith.constant 0 : i32
    %c0_i32_1 = arith.constant 0 : i32
    return %c0_i32, %c0_i32_0 : i32, i32
  }
  func.func @transform_3(%arg0: i32, %arg1: i32) -> (i32, i32) {
    %c0_i32 = arith.constant 0 : i32
    %c0_i32_0 = arith.constant 0 : i32
    %c0_i32_1 = arith.constant 0 : i32
    return %c0_i32, %c0_i32_0 : i32, i32
  }
  func.func @transform_4(%arg0: i32, %arg1: i32) -> (i32, i32) {
    %c0_i32 = arith.constant 0 : i32
    %c0_i32_0 = arith.constant 0 : i32
    %c0_i32_1 = arith.constant 0 : i32
    return %c0_i32, %c0_i32_0 : i32, i32
  }
  func.func @transform_5(%arg0: i32, %arg1: i32) -> (i32, i32) {
    %c0_i32 = arith.constant 0 : i32
    %c0_i32_0 = arith.constant 0 : i32
    %c0_i32_1 = arith.constant 0 : i32
    return %c0_i32, %c0_i32_0 : i32, i32
  }
  func.func @transform_6(%arg0: i32, %arg1: i32) -> (i32, i32, i32) {
    %c0_i32 = arith.constant 0 : i32
    %c0_i32_0 = arith.constant 0 : i32
    return %arg0, %arg1, %c0_i32 : i32, i32, i32
  }
  func.func @transform_7(%arg0: i32, %arg1: i32) -> (i32, i32, i32) {
    %c0_i32 = arith.constant 0 : i32
    %c0_i32_0 = arith.constant 0 : i32
    return %arg0, %arg1, %c0_i32 : i32, i32, i32
  }
}

module attributes {stable_mosaic.version = 11 : i64} {
  func.func @_tfs_kernel(%arg0: i32, %arg1: i32, %arg2: memref<2x16x128xf32, #tpu.memory_space<vmem>>, %arg3: memref<2x16x128xf32, #tpu.memory_space<vmem>>, %arg4: memref<16x128xf32, #tpu.memory_space<vmem>>, %arg5: memref<16x128xf32, #tpu.memory_space<vmem>>, %arg6: memref<128x256xf32, #tpu.memory_space<vmem>>, %arg7: memref<1x256xf32, #tpu.memory_space<vmem>>, %arg8: memref<2x8x256xf32, #tpu.memory_space<vmem>>, %arg9: memref<2x8x256xf32, #tpu.memory_space<vmem>>, %arg10: memref<2x256xf32, #tpu.memory_space<vmem>>) attributes {dimension_semantics = [#tpu.dimension_semantics<parallel>, #tpu.dimension_semantics<arbitrary>], iteration_bounds = array<i64: 2, 1>, scalar_prefetch = 0 : i64, scratch_operands = 1 : i64, tpu.core_type = #tpu.core_type<tc>, window_params = [{transform_indices = @transform_0, window_bounds = array<i64: 2, 16, 128>}, {transform_indices = @transform_1, window_bounds = array<i64: 2, 16, 128>}, {pipeline_mode = #tpu.pipeline_mode<synchronous>, transform_indices = @transform_2, window_bounds = array<i64: 16, 128>}, {pipeline_mode = #tpu.pipeline_mode<synchronous>, transform_indices = @transform_3, window_bounds = array<i64: 16, 128>}, {pipeline_mode = #tpu.pipeline_mode<synchronous>, transform_indices = @transform_4, window_bounds = array<i64: 128, 256>}, {pipeline_mode = #tpu.pipeline_mode<synchronous>, transform_indices = @transform_5, window_bounds = array<i64: 1, 256>}, {transform_indices = @transform_6, window_bounds = array<i64: 2, 8, 256>}, {transform_indices = @transform_7, window_bounds = array<i64: 2, 8, 256>}]} {
    %c0_i32 = arith.constant 0 : i32
    %0 = arith.cmpi eq, %arg1, %c0_i32 : i32
    %1 = arith.extui %0 : i1 to i32
    %c0_i32_0 = arith.constant 0 : i32
    %2 = arith.cmpi ne, %1, %c0_i32_0 : i32
    scf.if %2 {
      %c0_8 = arith.constant 0 : index
      %c0_9 = arith.constant 0 : index
      %c0_10 = arith.constant 0 : index
      %9 = vector.load %arg2[%c0_8, %c0_9, %c0_10] : memref<2x16x128xf32, #tpu.memory_space<vmem>>, vector<2x16x128xf32>
      %c0_11 = arith.constant 0 : index
      %c0_12 = arith.constant 0 : index
      %10 = vector.load %arg4[%c0_11, %c0_12] : memref<16x128xf32, #tpu.memory_space<vmem>>, vector<16x128xf32>
      %11 = vector.shape_cast %10 : vector<16x128xf32> to vector<1x16x128xf32>
      %12 = vector.broadcast %11 : vector<1x16x128xf32> to vector<2x16x128xf32>
      %13 = arith.mulf %9, %12 : vector<2x16x128xf32>
      %cst = arith.constant dense<0.000000e+00> : vector<2x128xf32>
      %14 = vector.multi_reduction <add>, %13, %cst [1] : vector<2x16x128xf32> to vector<2x128xf32>
      %c0_13 = arith.constant 0 : index
      %c0_14 = arith.constant 0 : index
      %c0_15 = arith.constant 0 : index
      %15 = vector.load %arg3[%c0_13, %c0_14, %c0_15] : memref<2x16x128xf32, #tpu.memory_space<vmem>>, vector<2x16x128xf32>
      %c0_16 = arith.constant 0 : index
      %c0_17 = arith.constant 0 : index
      %16 = vector.load %arg5[%c0_16, %c0_17] : memref<16x128xf32, #tpu.memory_space<vmem>>, vector<16x128xf32>
      %17 = vector.shape_cast %16 : vector<16x128xf32> to vector<1x16x128xf32>
      %18 = vector.broadcast %17 : vector<1x16x128xf32> to vector<2x16x128xf32>
      %19 = arith.mulf %15, %18 : vector<2x16x128xf32>
      %cst_18 = arith.constant dense<0.000000e+00> : vector<2x128xf32>
      %20 = vector.multi_reduction <add>, %19, %cst_18 [1] : vector<2x16x128xf32> to vector<2x128xf32>
      %21 = arith.subf %14, %20 : vector<2x128xf32>
      %c0_19 = arith.constant 0 : index
      %c0_20 = arith.constant 0 : index
      %22 = vector.load %arg6[%c0_19, %c0_20] : memref<128x256xf32, #tpu.memory_space<vmem>>, vector<128x256xf32>
      %cst_21 = arith.constant dense<0.000000e+00> : vector<2x256xf32>
      %23 = tpu.matmul %21, %22, %cst_21 {dimension_numbers = #tpu.dot_dimension_numbers<[1], [0], [0], [1], [0, 0, 1, 1], [], []>} : vector<2x128xf32>, vector<128x256xf32>, vector<2x256xf32> -> vector<2x256xf32>
      %c0_22 = arith.constant 0 : index
      %c0_23 = arith.constant 0 : index
      %24 = vector.load %arg7[%c0_22, %c0_23] : memref<1x256xf32, #tpu.memory_space<vmem>>, vector<1x256xf32>
      %25 = vector.broadcast %24 : vector<1x256xf32> to vector<2x256xf32>
      %26 = arith.addf %23, %25 : vector<2x256xf32>
      %c0_24 = arith.constant 0 : index
      %c0_25 = arith.constant 0 : index
      %27 = vector.load %arg10[%c0_24, %c0_25] : memref<2x256xf32, #tpu.memory_space<vmem>>, vector<2x256xf32>
      tpu.vector_store %arg10[%c0_24, %c0_25], %26 {strides = array<i32>} : memref<2x256xf32, #tpu.memory_space<vmem>>, vector<2x256xf32>,
    } else {
    }
    %c0 = arith.constant 0 : index
    %c0_1 = arith.constant 0 : index
    %3 = vector.load %arg10[%c0, %c0_1] : memref<2x256xf32, #tpu.memory_space<vmem>>, vector<2x256xf32>
    %4 = vector.shape_cast %3 : vector<2x256xf32> to vector<2x1x256xf32>
    %c0_2 = arith.constant 0 : index
    %c0_3 = arith.constant 0 : index
    %c0_4 = arith.constant 0 : index
    %5 = vector.load %arg8[%c0_2, %c0_3, %c0_4] : memref<2x8x256xf32, #tpu.memory_space<vmem>>, vector<2x8x256xf32>
    %6 = vector.broadcast %4 : vector<2x1x256xf32> to vector<2x8x256xf32>
    %7 = arith.mulf %5, %6 : vector<2x8x256xf32>
    %c0_5 = arith.constant 0 : index
    %c0_6 = arith.constant 0 : index
    %c0_7 = arith.constant 0 : index
    %8 = vector.load %arg9[%c0_5, %c0_6, %c0_7] : memref<2x8x256xf32, #tpu.memory_space<vmem>>, vector<2x8x256xf32>
    tpu.vector_store %arg9[%c0_5, %c0_6, %c0_7], %7 {strides = array<i32>} : memref<2x8x256xf32, #tpu.memory_space<vmem>>, vector<2x8x256xf32>,
    return
  }
  func.func @transform_0(%arg0: i32, %arg1: i32) -> (i32, i32, i32) {
    %c0_i32 = arith.constant 0 : i32
    %c0_i32_0 = arith.constant 0 : i32
    %c0_i32_1 = arith.constant 0 : i32
    return %arg0, %c0_i32, %c0_i32_0 : i32, i32, i32
  }
  func.func @transform_1(%arg0: i32, %arg1: i32) -> (i32, i32, i32) {
    %c0_i32 = arith.constant 0 : i32
    %c0_i32_0 = arith.constant 0 : i32
    %c0_i32_1 = arith.constant 0 : i32
    return %arg0, %c0_i32, %c0_i32_0 : i32, i32, i32
  }
  func.func @transform_2(%arg0: i32, %arg1: i32) -> (i32, i32) {
    %c0_i32 = arith.constant 0 : i32
    %c0_i32_0 = arith.constant 0 : i32
    %c0_i32_1 = arith.constant 0 : i32
    return %c0_i32, %c0_i32_0 : i32, i32
  }
  func.func @transform_3(%arg0: i32, %arg1: i32) -> (i32, i32) {
    %c0_i32 = arith.constant 0 : i32
    %c0_i32_0 = arith.constant 0 : i32
    %c0_i32_1 = arith.constant 0 : i32
    return %c0_i32, %c0_i32_0 : i32, i32
  }
  func.func @transform_4(%arg0: i32, %arg1: i32) -> (i32, i32) {
    %c0_i32 = arith.constant 0 : i32
    %c0_i32_0 = arith.constant 0 : i32
    %c0_i32_1 = arith.constant 0 : i32
    return %c0_i32, %c0_i32_0 : i32, i32
  }
  func.func @transform_5(%arg0: i32, %arg1: i32) -> (i32, i32) {
    %c0_i32 = arith.constant 0 : i32
    %c0_i32_0 = arith.constant 0 : i32
    %c0_i32_1 = arith.constant 0 : i32
    return %c0_i32, %c0_i32_0 : i32, i32
  }
  func.func @transform_6(%arg0: i32, %arg1: i32) -> (i32, i32, i32) {
    %c0_i32 = arith.constant 0 : i32
    %c0_i32_0 = arith.constant 0 : i32
    return %arg0, %arg1, %c0_i32 : i32, i32, i32
  }
  func.func @transform_7(%arg0: i32, %arg1: i32) -> (i32, i32, i32) {
    %c0_i32 = arith.constant 0 : i32
    %c0_i32_0 = arith.constant 0 : i32
    return %arg0, %arg1, %c0_i32 : i32, i32, i32
  }
}

</mosaic_0001>

<llo_original>
// kernel: tpu_custom_call.1
$region0: #{tpu_custom_call.1}
  #allocation0 [shape = 'u32[]', space=smem, size = 0x4, offset = 0x4, fixed_abs, tag = 'smem constant byte address 0x4 - core index']
  #allocation1 [shape = 'u32[72,128]{1,0:T(1,128)}', space=vmem, size = 0x9000, scoped, tag = 'internal scratch']
  #allocation2 [shape = 'f32[2,256]{1,0:T(2,128)}', space=vmem, size = 0x800, scoped, tag = 'scratch operand']
  %s0 = inlined_call_operand.hbm [shape: f32[4,16,128], index: 0, kind: input, shape index: {}]
  %s1 = inlined_call_operand.hbm [shape: f32[4,16,128], index: 1, kind: input, shape index: {}]
  %s2 = inlined_call_operand.hbm [shape: f32[16,128], index: 2, kind: input, shape index: {}]
  %s3 = inlined_call_operand.hbm [shape: f32[16,128], index: 3, kind: input, shape index: {}]
  %s4 = inlined_call_operand.hbm [shape: f32[128,256], index: 4, kind: input, shape index: {}]
  %s5 = inlined_call_operand.vmem [shape: f32[1,256], index: 5, kind: input, shape index: {}]
  %s6 = inlined_call_operand.hbm [shape: f32[4,8,256], index: 6, kind: input, shape index: {}]
  %s7 = inlined_call_operand.hbm [shape: f32[4,8,256], index: 7, kind: output, shape index: {}]
  %s8 = sld [smem:[#allocation0]]
  $region89: #{tpu_custom_call.1} parent=0
    _
  %s10 = ssub.s32 1, %s8
  %s11 = scalar_select 0, %s10, %s8
  $region1: #{tpu_custom_call.1} parent=0
    #allocation3 [shape = 'u8[32768]{0}', space=vmem, size = 0x8000, scoped, tag = 'input window, operand 0']
    #allocation4 [shape = 's32[2]{0}', space=sflag, size = 0x8, scoped, tag = 'scoped memory for tpu_custom_call.1']
    #allocation5 [shape = 's32[2]{0}', space=sflag, size = 0x8, scoped, tag = 'scoped memory for tpu_custom_call.1']
    #allocation6 [shape = 'u8[32768]{0}', space=vmem, size = 0x8000, scoped, tag = 'input window, operand 1']
    #allocation7 [shape = 's32[2]{0}', space=sflag, size = 0x8, scoped, tag = 'scoped memory for tpu_custom_call.1']
    #allocation8 [shape = 'u8[8192]{0}', space=vmem, size = 0x2000, scoped, tag = 'input window, operand 2, single buffered']
    #allocation9 [shape = 'u8[8192]{0}', space=vmem, size = 0x2000, scoped, tag = 'input window, operand 3, single buffered']
    #allocation10 [shape = 's32[1]{0}', space=sflag, size = 0x4, scoped, tag = 'scoped memory for tpu_custom_call.1']
    #allocation11 [shape = 'u8[131072]{0}', space=vmem, size = 0x20000, scoped, tag = 'input window, operand 4, single buffered']
    #allocation12 [shape = 'u8[32768]{0}', space=vmem, size = 0x8000, scoped, tag = 'input window, operand 6']
    #allocation13 [shape = 's32[2]{0}', space=sflag, size = 0x8, scoped, tag = 'scoped memory for tpu_custom_call.1']
    #allocation14 [shape = 'u8[32768]{0}', space=vmem, size = 0x8000, scoped, tag = 'output window, operand 0']
    %12 = vsyncpa [#allocation4], 0
    %s13 = scalar_lea.sflag [#allocation4], 1
    %14 = vsyncpa %s13, 0
    %15 = vsyncpa [#allocation7], 0
    %s16 = scalar_lea.sflag [#allocation7], 1
    %17 = vsyncpa %s16, 0
    %18 = vsyncpa [#allocation10], 0
    %19 = vsyncpa [#allocation13], 0
    %s20 = scalar_lea.sflag [#allocation13], 1
    %21 = vsyncpa %s20, 0
    %22 = vsyncpa [#allocation5], 0
    %s23 = scalar_lea.sflag [#allocation5], 1
    %24 = vsyncpa %s23, 0
    loop: start=0, step=1, limit=4
    $region2: #{tpu_custom_call.1} parent=1 // loop_pre_header
      _
    $region3: #{tpu_custom_call.1} parent=1 // loop_header
      %s26 = sphi 0, %s30
      %p27 = scmp.ge.s32.totalorder %s26, 4
      %s33 = sphi 0, %s45
      %s34 = sphi 0, %s41
      %s35 = sphi 0, %s33
      %s36 = sphi 0, %s34
      %s37 = sphi 0, %s35
      %s38 = sphi 0, %s36
      %s48 = sphi 0, %s50
      %s51 = sphi 0, %s48
      %s52 = sphi 0, %s51
      %s68 = sphi 0, %s52
      %s74 = sphi 0, %s76
      %s77 = sphi 0, %s74
      %s78 = sphi 0, %s77
      %s94 = sphi 0, %s78
      %s98 = sphi 0, %s98
      %s100 = sphi 0, %s98
      %s101 = sphi 0, %s100
      %s115 = sphi 0, %s101
      %s119 = sphi 0, %s119
      %s121 = sphi 0, %s119
      %s122 = sphi 0, %s121
      %s136 = sphi 0, %s122
      %s140 = sphi 0, %s140
      %s142 = sphi 0, %s140
      %s143 = sphi 0, %s142
      %s157 = sphi 0, %s143
      %s161 = sphi 0, %s161
      %s163 = sphi 0, %s161
      %s164 = sphi 0, %s163
      %s178 = sphi 0, %s164
      %s186 = sphi 0, %s188
      %s189 = sphi 0, %s186
      %s190 = sphi 0, %s189
      %s206 = sphi 0, %s190
      %s214 = sphi 0, %s216
      %s217 = sphi 0, %s214
      %s218 = sphi 0, %s217
      %s234 = sphi 0, %s218
    $region4: #{tpu_custom_call.1} parent=1 // loop_header_branch
      %29 = sbr.rel (%p27) target = $region8
    $region5: #{tpu_custom_call.1} parent=1 // loop_body
      %s31 = ssub.s32 %s26, 1
      %s32 = ssub.s32 %s26, 2
      %s39 = sadd.s32 1, %s34
      %p40 = scmp.ge.s32.totalorder %s39, 1
      %s41 = scalar_select %p40, 0, %s39
      %s42 = sadd.s32 1, %s33
      %s43 = scalar_select %p40, %s42, %s33
      %p44 = scmp.ge.s32.totalorder %s43, 2
      %s45 = scalar_select %p44, 0, %s43
      %s46 = ssub.s32 %s33, %s45
      %p47 = scmp.eq.s32.totalorder %s46, 0
      %s49 = sadd.s32 %s48, 1
      %s50 = scalar_select %p47, %s48, %s49
      %p53 = pneg %p47
      %p54 = scmp.eq.s32.totalorder %s26, 1
      %p55 = por %p53, %p54
      %p56 = scmp.ne.s32.totalorder %s48, %s51
      %p57 = scmp.eq.s32.totalorder %s26, 0
      %p58 = por %p56, %p57
      %p59 = scmp.ne.s32.totalorder %s48, %s51
      %p60 = scmp.eq.s32.totalorder %s31, 1
      %p61 = por %p59, %p60
      %p62 = scmp.ne.s32.totalorder %s51, %s52
      %p63 = scmp.eq.s32.totalorder %s31, 0
      %p64 = por %p62, %p63
      %p65 = scmp.ne.s32.totalorder %s51, %s52
      %p66 = scmp.eq.s32.totalorder %s32, 1
      %p67 = por %p65, %p66
      %p69 = scmp.ne.s32.totalorder %s52, %s68
      %p70 = scmp.eq.s32.totalorder %s32, 0
      %p71 = por %p69, %p70
      %s72 = ssub.s32 %s33, %s45
      %p73 = scmp.eq.s32.totalorder %s72, 0
      %s75 = sadd.s32 %s74, 1
      %s76 = scalar_select %p73, %s74, %s75
      %p79 = pneg %p73
      %p80 = scmp.eq.s32.totalorder %s26, 1
      %p81 = por %p79, %p80
      %p82 = scmp.ne.s32.totalorder %s74, %s77
      %p83 = scmp.eq.s32.totalorder %s26, 0
      %p84 = por %p82, %p83
      %p85 = scmp.ne.s32.totalorder %s74, %s77
      %p86 = scmp.eq.s32.totalorder %s31, 1
      %p87 = por %p85, %p86
      %p88 = scmp.ne.s32.totalorder %s77, %s78
      %p89 = scmp.eq.s32.totalorder %s31, 0
      %p90 = por %p88, %p89
      %p91 = scmp.ne.s32.totalorder %s77, %s78
      %p92 = scmp.eq.s32.totalorder %s32, 1
      %p93 = por %p91, %p92
      %p95 = scmp.ne.s32.totalorder %s78, %s94
      %p96 = scmp.eq.s32.totalorder %s32, 0
      %p97 = por %p95, %p96
      %s99 = sadd.s32 %s98, 1
      %p102 = scmp.eq.s32.totalorder %s26, 1
      %p103 = scmp.ne.s32.totalorder %s98, %s100
      %p104 = scmp.eq.s32.totalorder %s26, 0
      %p105 = por %p103, %p104
      %p106 = scmp.ne.s32.totalorder %s98, %s100
      %p107 = scmp.eq.s32.totalorder %s31, 1
      %p108 = por %p106, %p107
      %p109 = scmp.ne.s32.totalorder %s100, %s101
      %p110 = scmp.eq.s32.totalorder %s31, 0
      %p111 = por %p109, %p110
      %p112 = scmp.ne.s32.totalorder %s100, %s101
      %p113 = scmp.eq.s32.totalorder %s32, 1
      %p114 = por %p112, %p113
      %p116 = scmp.ne.s32.totalorder %s101, %s115
      %p117 = scmp.eq.s32.totalorder %s32, 0
      %p118 = por %p116, %p117
      %s120 = sadd.s32 %s119, 1
      %p123 = scmp.eq.s32.totalorder %s26, 1
      %p124 = scmp.ne.s32.totalorder %s119, %s121
      %p125 = scmp.eq.s32.totalorder %s26, 0
      %p126 = por %p124, %p125
      %p127 = scmp.ne.s32.totalorder %s119, %s121
      %p128 = scmp.eq.s32.totalorder %s31, 1
      %p129 = por %p127, %p128
      %p130 = scmp.ne.s32.totalorder %s121, %s122
      %p131 = scmp.eq.s32.totalorder %s31, 0
      %p132 = por %p130, %p131
      %p133 = scmp.ne.s32.totalorder %s121, %s122
      %p134 = scmp.eq.s32.totalorder %s32, 1
      %p135 = por %p133, %p134
      %p137 = scmp.ne.s32.totalorder %s122, %s136
      %p138 = scmp.eq.s32.totalorder %s32, 0
      %p139 = por %p137, %p138
      %s141 = sadd.s32 %s140, 1
      %p144 = scmp.eq.s32.totalorder %s26, 1
      %p145 = scmp.ne.s32.totalorder %s140, %s142
      %p146 = scmp.eq.s32.totalorder %s26, 0
      %p147 = por %p145, %p146
      %p148 = scmp.ne.s32.totalorder %s140, %s142
      %p149 = scmp.eq.s32.totalorder %s31, 1
      %p150 = por %p148, %p149
      %p151 = scmp.ne.s32.totalorder %s142, %s143
      %p152 = scmp.eq.s32.totalorder %s31, 0
      %p153 = por %p151, %p152
      %p154 = scmp.ne.s32.totalorder %s142, %s143
      %p155 = scmp.eq.s32.totalorder %s32, 1
      %p156 = por %p154, %p155
      %p158 = scmp.ne.s32.totalorder %s143, %s157
      %p159 = scmp.eq.s32.totalorder %s32, 0
      %p160 = por %p158, %p159
      %s162 = sadd.s32 %s161, 1
      %p165 = scmp.eq.s32.totalorder %s26, 1
      %p166 = scmp.ne.s32.totalorder %s161, %s163
      %p167 = scmp.eq.s32.totalorder %s26, 0
      %p168 = por %p166, %p167
      %p169 = scmp.ne.s32.totalorder %s161, %s163
      %p170 = scmp.eq.s32.totalorder %s31, 1
      %p171 = por %p169, %p170
      %p172 = scmp.ne.s32.totalorder %s163, %s164
      %p173 = scmp.eq.s32.totalorder %s31, 0
      %p174 = por %p172, %p173
      %p175 = scmp.ne.s32.totalorder %s163, %s164
      %p176 = scmp.eq.s32.totalorder %s32, 1
      %p177 = por %p175, %p176
      %p179 = scmp.ne.s32.totalorder %s164, %s178
      %p180 = scmp.eq.s32.totalorder %s32, 0
      %p181 = por %p179, %p180
      %s182 = ssub.s32 %s33, %s45
      %s183 = ssub.s32 %s34, %s41
      %s184 = sor.u32 %s182, %s183
      %p185 = scmp.eq.s32.totalorder %s184, 0
      %s187 = sadd.s32 %s186, 1
      %s188 = scalar_select %p185, %s186, %s187
      %p191 = pneg %p185
      %p192 = scmp.eq.s32.totalorder %s26, 1
      %p193 = por %p191, %p192
      %p194 = scmp.ne.s32.totalorder %s186, %s189
      %p195 = scmp.eq.s32.totalorder %s26, 0
      %p196 = por %p194, %p195
      %p197 = scmp.ne.s32.totalorder %s186, %s189
      %p198 = scmp.eq.s32.totalorder %s31, 1
      %p199 = por %p197, %p198
      %p200 = scmp.ne.s32.totalorder %s189, %s190
      %p201 = scmp.eq.s32.totalorder %s31, 0
      %p202 = por %p200, %p201
      %p203 = scmp.ne.s32.totalorder %s189, %s190
      %p204 = scmp.eq.s32.totalorder %s32, 1
      %p205 = por %p203, %p204
      %p207 = scmp.ne.s32.totalorder %s190, %s206
      %p208 = scmp.eq.s32.totalorder %s32, 0
      %p209 = por %p207, %p208
      %s210 = ssub.s32 %s33, %s45
      %s211 = ssub.s32 %s34, %s41
      %s212 = sor.u32 %s210, %s211
      %p213 = scmp.eq.s32.totalorder %s212, 0
      %s215 = sadd.s32 %s214, 1
      %s216 = scalar_select %p213, %s214, %s215
      %p219 = pneg %p213
      %p220 = scmp.eq.s32.totalorder %s26, 1
      %p221 = por %p219, %p220
      %p222 = scmp.ne.s32.totalorder %s214, %s217
      %p223 = scmp.eq.s32.totalorder %s26, 0
      %p224 = por %p222, %p223
      %p225 = scmp.ne.s32.totalorder %s214, %s217
      %p226 = scmp.eq.s32.totalorder %s31, 1
      %p227 = por %p225, %p226
      %p228 = scmp.ne.s32.totalorder %s217, %s218
      %p229 = scmp.eq.s32.totalorder %s31, 0
      %p230 = por %p228, %p229
      %p231 = scmp.ne.s32.totalorder %s217, %s218
      %p232 = scmp.eq.s32.totalorder %s32, 1
      %p233 = por %p231, %p232
      %p235 = scmp.ne.s32.totalorder %s218, %s234
      %p236 = scmp.eq.s32.totalorder %s32, 0
      %p237 = por %p235, %p236
      %p238 = scmp.le.s32.totalorder 1, %s26
      %p239 = scmp.lt.s32.totalorder %s26, 3
      %p240 = pnand %p238, %p239
      %p241 = pneg %p240
      // Predicated region
      $region9: #{tpu_custom_call.1} parent=5 // pred_check
        _
      $region10: #{tpu_custom_call.1} parent=5 // pred_check_branch
        %243 = sbr.rel (%p240) target = $region12
      $region11: #{tpu_custom_call.1} parent=5 // pred_region
        %s244 = ssub.s32 %s26, 1
        // Predicated region
        $region13: #{tpu_custom_call.1} parent=11 // pred_check
          %p245 = pneg %p111
        $region14: #{tpu_custom_call.1} parent=11 // pred_check_branch
          %247 = sbr.rel (%p245) target = $region16
        $region15: #{tpu_custom_call.1} parent=11 // pred_region
          %249 = vsyncadd [#allocation7], 0
          %s250 = sshll.u32 %s2, 4
          %s251 = int_to_ptr.hbm [resolvable:$true] %s250
          %s252 = sshll.u32 [#allocation8], 4
          %s253 = int_to_ptr.vmem [resolvable:$true] %s252
          %258 = dma.hbm_to_vmem [thread:$0]  %s251, 256, %s253, [#allocation7], 128, 128, 8
        $region16: #{tpu_custom_call.1} parent=11 // pred_fallthru
          _
        // Predicated region
        $region17: #{tpu_custom_call.1} parent=11 // pred_check
          %p259 = pneg %p132
        $region18: #{tpu_custom_call.1} parent=11 // pred_check_branch
          %261 = sbr.rel (%p259) target = $region20
        $region19: #{tpu_custom_call.1} parent=11 // pred_region
          %263 = vsyncadd [#allocation10], 0
          %s264 = sshll.u32 %s3, 4
          %s265 = int_to_ptr.hbm [resolvable:$true] %s264
          %s266 = sshll.u32 [#allocation9], 4
          %s267 = int_to_ptr.vmem [resolvable:$true] %s266
          %272 = dma.hbm_to_vmem [thread:$0]  %s265, 256, %s267, [#allocation10], 128, 128, 8
        $region20: #{tpu_custom_call.1} parent=11 // pred_fallthru
          _
        // Predicated region
        $region21: #{tpu_custom_call.1} parent=11 // pred_check
          %p273 = pneg %p153
        $region22: #{tpu_custom_call.1} parent=11 // pred_check_branch
          %275 = sbr.rel (%p273) target = $region24
        $region23: #{tpu_custom_call.1} parent=11 // pred_region
          %277 = vsyncadd [#allocation10], 0
          %s278 = sshll.u32 %s4, 4
          %s279 = int_to_ptr.hbm [resolvable:$true] %s278
          %s280 = sshll.u32 [#allocation11], 4
          %s281 = int_to_ptr.vmem [resolvable:$true] %s280
          %286 = dma.hbm_to_vmem [thread:$0]  %s279, 4096, %s281, [#allocation10], 256, 256, 16
        $region24: #{tpu_custom_call.1} parent=11 // pred_fallthru
          _
        // Predicated region
        $region25: #{tpu_custom_call.1} parent=11 // pred_check
          %p287 = pneg %p174
        $region26: #{tpu_custom_call.1} parent=11 // pred_check_branch
          %289 = sbr.rel (%p287) target = $region28
        $region27: #{tpu_custom_call.1} parent=11 // pred_region
          _
        $region28: #{tpu_custom_call.1} parent=11 // pred_fallthru
          _
      $region12: #{tpu_custom_call.1} parent=5 // pred_fallthru
        _
      %p290 = scmp.lt.s32.totalorder %s26, 2
      // Predicated region
      $region29: #{tpu_custom_call.1} parent=5 // pred_check
        %p291 = pneg %p290
      $region30: #{tpu_custom_call.1} parent=5 // pred_check_branch
        %293 = sbr.rel (%p291) target = $region32
      $region31: #{tpu_custom_call.1} parent=5 // pred_region
        // Predicated region
        $region33: #{tpu_custom_call.1} parent=31 // pred_check
          %p294 = pneg %p58
        $region34: #{tpu_custom_call.1} parent=31 // pred_check_branch
          %296 = sbr.rel (%p294) target = $region36
        $region35: #{tpu_custom_call.1} parent=31 // pred_region
          %s297 = sand.u32 %s48, 1
          %s298 = scalar_lea.sflag [#allocation4], %s297
          %s299 = sand.u32 %s48, 1
          %s300 = smul.addr %s299, 32
          %s301 = scalar_lea.vmem [#allocation3], %s300
          %s302 = smul.u32 2, %s33
          %304 = vsyncadd %s298, 0
          %s305 = smul.addr %s302, 2
          %s306 = smul.addr %s305, 8
          %s307 = scalar_lea.hbm %s0, %s306
          %s308 = sshll.u32 %s307, 4
          %s309 = int_to_ptr.hbm [resolvable:$true] %s308
          %s310 = sshll.u32 %s301, 4
          %s311 = int_to_ptr.vmem [resolvable:$true] %s310
          %316 = dma.hbm_to_vmem [thread:$0]  %s309, 512, %s311, %s298, 128, 128, 8
        $region36: #{tpu_custom_call.1} parent=31 // pred_fallthru
          _
        // Predicated region
        $region37: #{tpu_custom_call.1} parent=31 // pred_check
          %p317 = pneg %p84
        $region38: #{tpu_custom_call.1} parent=31 // pred_check_branch
          %319 = sbr.rel (%p317) target = $region40
        $region39: #{tpu_custom_call.1} parent=31 // pred_region
          %s320 = sand.u32 %s26, 1
          %s321 = scalar_lea.sflag [#allocation7], %s320
          %s322 = sand.u32 %s74, 1
          %s323 = smul.addr %s322, 32
          %s324 = scalar_lea.vmem [#allocation6], %s323
          %s325 = smul.u32 2, %s33
          %327 = vsyncadd %s321, 0
          %s328 = smul.addr %s325, 2
          %s329 = smul.addr %s328, 8
          %s330 = scalar_lea.hbm %s1, %s329
          %s331 = sshll.u32 %s330, 4
          %s332 = int_to_ptr.hbm [resolvable:$true] %s331
          %s333 = sshll.u32 %s324, 4
          %s334 = int_to_ptr.vmem [resolvable:$true] %s333
          %339 = dma.hbm_to_vmem [thread:$0]  %s332, 512, %s334, %s321, 128, 128, 8
        $region40: #{tpu_custom_call.1} parent=31 // pred_fallthru
          _
        // Predicated region
        $region41: #{tpu_custom_call.1} parent=31 // pred_check
          %p340 = pneg %p196
        $region42: #{tpu_custom_call.1} parent=31 // pred_check_branch
          %342 = sbr.rel (%p340) target = $region44
        $region43: #{tpu_custom_call.1} parent=31 // pred_region
          %s343 = sand.u32 %s186, 1
          %s344 = scalar_lea.sflag [#allocation13], %s343
          %s345 = sand.u32 %s186, 1
          %s346 = smul.addr %s345, 32
          %s347 = scalar_lea.vmem [#allocation12], %s346
          %s348 = smul.u32 2, %s33
          %350 = vsyncadd %s344, 0
          %s351 = smul.addr %s34, 2
          %s352 = smul.addr %s348, 2
          %s353 = sadd.s32 %s351, %s352
          %s354 = smul.addr %s353, 8
          %s355 = scalar_lea.hbm %s6, %s354
          %s356 = sshll.u32 %s355, 4
          %s357 = int_to_ptr.hbm [resolvable:$true] %s356
          %s358 = sshll.u32 %s347, 4
          %s359 = int_to_ptr.vmem [resolvable:$true] %s358
          %364 = dma.hbm_to_vmem [thread:$0]  %s357, 512, %s359, %s344, 256, 256, 16
        $region44: #{tpu_custom_call.1} parent=31 // pred_fallthru
          _
      $region32: #{tpu_custom_call.1} parent=5 // pred_fallthru
        _
      %p365 = scmp.le.s32.totalorder 1, %s26
      %p366 = scmp.lt.s32.totalorder %s26, 3
      %p367 = pnand %p365, %p366
      %p368 = pneg %p367
      // Predicated region
      $region45: #{tpu_custom_call.1} parent=5 // pred_check
        _
      $region46: #{tpu_custom_call.1} parent=5 // pred_check_branch
        %370 = sbr.rel (%p367) target = $region48
      $region47: #{tpu_custom_call.1} parent=5 // pred_region
        %s371 = ssub.s32 %s26, 1
        %s372 = sand.u32 %s51, 1
        %s373 = scalar_lea.sflag [#allocation4], %s372
        %s374 = sand.u32 %s51, 1
        %s375 = smul.addr %s374, 32
        %s376 = scalar_lea.vmem [#allocation3], %s375
        // Predicated region
        $region49: #{tpu_custom_call.1} parent=47 // pred_check
          %p377 = pneg %p64
        $region50: #{tpu_custom_call.1} parent=47 // pred_check_branch
          %379 = sbr.rel (%p377) target = $region52
        $region51: #{tpu_custom_call.1} parent=47 // pred_region
          %381 = dma.done %s373, 512
        $region52: #{tpu_custom_call.1} parent=47 // pred_fallthru
          _
        %s382 = sand.u32 %s31, 1
        %s383 = scalar_lea.sflag [#allocation7], %s382
        %s384 = sand.u32 %s77, 1
        %s385 = smul.addr %s384, 32
        %s386 = scalar_lea.vmem [#allocation6], %s385
        // Predicated region
        $region53: #{tpu_custom_call.1} parent=47 // pred_check
          %p387 = pneg %p90
        $region54: #{tpu_custom_call.1} parent=47 // pred_check_branch
          %389 = sbr.rel (%p387) target = $region56
        $region55: #{tpu_custom_call.1} parent=47 // pred_region
          %391 = dma.done %s383, 512
        $region56: #{tpu_custom_call.1} parent=47 // pred_fallthru
          _
        // Predicated region
        $region57: #{tpu_custom_call.1} parent=47 // pred_check
          %p392 = pneg %p111
        $region58: #{tpu_custom_call.1} parent=47 // pred_check_branch
          %394 = sbr.rel (%p392) target = $region60
        $region59: #{tpu_custom_call.1} parent=47 // pred_region
          %396 = dma.done [#allocation7], 256
        $region60: #{tpu_custom_call.1} parent=47 // pred_fallthru
          _
        // Predicated region
        $region61: #{tpu_custom_call.1} parent=47 // pred_check
          %p397 = pneg %p132
        $region62: #{tpu_custom_call.1} parent=47 // pred_check_branch
          %399 = sbr.rel (%p397) target = $region64
        $region63: #{tpu_custom_call.1} parent=47 // pred_region
          %401 = dma.done [#allocation10], 256
        $region64: #{tpu_custom_call.1} parent=47 // pred_fallthru
          _
        // Predicated region
        $region65: #{tpu_custom_call.1} parent=47 // pred_check
          %p402 = pneg %p153
        $region66: #{tpu_custom_call.1} parent=47 // pred_check_branch
          %404 = sbr.rel (%p402) target = $region68
        $region67: #{tpu_custom_call.1} parent=47 // pred_region
          %406 = dma.done [#allocation10], 4096
        $region68: #{tpu_custom_call.1} parent=47 // pred_fallthru
          _
        %s407 = sand.u32 %s189, 1
        %s408 = scalar_lea.sflag [#allocation13], %s407
        %s409 = sand.u32 %s189, 1
        %s410 = smul.addr %s409, 32
        %s411 = scalar_lea.vmem [#allocation12], %s410
        // Predicated region
        $region69: #{tpu_custom_call.1} parent=47 // pred_check
          %p412 = pneg %p202
        $region70: #{tpu_custom_call.1} parent=47 // pred_check_branch
          %414 = sbr.rel (%p412) target = $region72
        $region71: #{tpu_custom_call.1} parent=47 // pred_region
          %416 = dma.done %s408, 512
        $region72: #{tpu_custom_call.1} parent=47 // pred_fallthru
          _
        %s417 = sand.u32 %s51, 1
        %s418 = scalar_lea.sflag [#allocation4], %s417
        %s419 = sand.u32 %s51, 1
        %s420 = smul.addr %s419, 32
        %s421 = scalar_lea.vmem [#allocation3], %s420
        %p422 = pneg %p64
        %p423 = pneg %p61
        %s424 = sand.u32 %s31, 1
        %s425 = scalar_lea.sflag [#allocation7], %s424
        %s426 = sand.u32 %s77, 1
        %s427 = smul.addr %s426, 32
        %s428 = scalar_lea.vmem [#allocation6], %s427
        %p429 = pneg %p90
        %p430 = pneg %p87
        %p431 = pneg %p111
        %p432 = pneg %p108
        %p433 = pneg %p132
        %p434 = pneg %p129
        %p435 = pneg %p153
        %p436 = pneg %p150
        %p437 = pneg %p174
        %p438 = pneg %p171
        %s439 = sand.u32 %s189, 1
        %s440 = scalar_lea.sflag [#allocation13], %s439
        %s441 = sand.u32 %s189, 1
        %s442 = smul.addr %s441, 32
        %s443 = scalar_lea.vmem [#allocation12], %s442
        %p444 = pneg %p202
        %p445 = pneg %p199
        %p446 = pneg %p230
        %p447 = pneg %p227
        %s448 = sand.u32 %s217, 1
        %s449 = scalar_lea.sflag [#allocation5], %s448
        %s450 = sand.u32 %s217, 1
        %s451 = smul.addr %s450, 32
        %s452 = scalar_lea.vmem [#allocation14], %s451
        %s453 = smul.u32 2, %s35
        %s454 = smul.u32 2, %s35
        %s455 = smul.u32 2, %s35
        %s456 = smul.u32 2, %s35
        %p457 = scmp.eq.s32.totalorder %s36, 0
        // Predicated region
        $region73: #{tpu_custom_call.1} parent=47 // pred_check
          %p458 = pneg %p457
        $region74: #{tpu_custom_call.1} parent=47 // pred_check_branch
          %460 = sbr.rel (%p458) target = $region76
        $region75: #{tpu_custom_call.1} parent=47 // pred_region
          %v461 = vld [vmem:[%s376] sm:$0xff]
          %v462 = vld [vmem:[%s376 + $0x8] sm:$0xff]
          %v463 = vld [vmem:[%s376 + $0x10] sm:$0xff]
          %v464 = vld [vmem:[%s376 + $0x18] sm:$0xff]
          %v465 = vld [vmem:[#allocation8] sm:$0xff]
          %v466 = vld [vmem:[#allocation8 + $0x8] sm:$0xff]
          %v467 = vmul.f32 %v461, %v465
          %v468 = vmul.f32 %v462, %v466
          %v469 = vmul.f32 %v463, %v465
          %v470 = vmul.f32 %v464, %v466
          %v471 = vadd.f32 %v467, %v468
          %v472 = vrot.slane %v471, 4
          %v473 = vadd.f32 %v471, %v472
          %v474 = vrot.slane %v473, 2
          %v475 = vadd.f32 %v473, %v474
          %v476 = vrot.slane %v475, 1
          %v477 = vadd.f32 %v475, %v476
          %v478 = vadd.f32 %v469, %v470
          %v479 = vrot.slane %v478, 4
          %v480 = vadd.f32 %v478, %v479
          %v481 = vrot.slane %v480, 2
          %v482 = vadd.f32 %v480, %v481
          %v483 = vrot.slane %v482, 1
          %v484 = vadd.f32 %v482, %v483
          %v485 = vld [vmem:[%s386] sm:$0xff]
          %v486 = vld [vmem:[%s386 + $0x8] sm:$0xff]
          %v487 = vld [vmem:[%s386 + $0x10] sm:$0xff]
          %v488 = vld [vmem:[%s386 + $0x18] sm:$0xff]
          %v489 = vld [vmem:[#allocation9] sm:$0xff]
          %v490 = vld [vmem:[#allocation9 + $0x8] sm:$0xff]
          %v491 = vmul.f32 %v485, %v489
          %v492 = vmul.f32 %v486, %v490
          %v493 = vmul.f32 %v487, %v489
          %v494 = vmul.f32 %v488, %v490
          %v495 = vadd.f32 %v491, %v492
          %v496 = vrot.slane %v495, 4
          %v497 = vadd.f32 %v495, %v496
          %v498 = vrot.slane %v497, 2
          %v499 = vadd.f32 %v497, %v498
          %v500 = vrot.slane %v499, 1
          %v501 = vadd.f32 %v499, %v500
          %v502 = vadd.f32 %v493, %v494
          %v503 = vrot.slane %v502, 4
          %v504 = vadd.f32 %v502, %v503
          %v505 = vrot.slane %v504, 2
          %v506 = vadd.f32 %v504, %v505
          %v507 = vrot.slane %v506, 1
          %v508 = vadd.f32 %v506, %v507
          %v509 = vsub.f32 %v477, %v501
          %v510 = vsub.f32 %v484, %v508
          %v511 = vld [vmem:[#allocation11] sm:$0xff]
          %v512 = vld [vmem:[#allocation11 + $0x8] sm:$0xff]
          %v513 = vld [vmem:[#allocation11 + $0x10] sm:$0xff]
          %v514 = vld [vmem:[#allocation11 + $0x18] sm:$0xff]
          %v515 = vld [vmem:[#allocation11 + $0x20] sm:$0xff]
          %v516 = vld [vmem:[#allocation11 + $0x28] sm:$0xff]
          %v517 = vld [vmem:[#allocation11 + $0x30] sm:$0xff]
          %v518 = vld [vmem:[#allocation11 + $0x38] sm:$0xff]
          %v519 = vld [vmem:[#allocation11 + $0x40] sm:$0xff]
          %v520 = vld [vmem:[#allocation11 + $0x48] sm:$0xff]
          %v521 = vld [vmem:[#allocation11 + $0x50] sm:$0xff]
          %v522 = vld [vmem:[#allocation11 + $0x58] sm:$0xff]
          %v523 = vld [vmem:[#allocation11 + $0x60] sm:$0xff]
          %v524 = vld [vmem:[#allocation11 + $0x68] sm:$0xff]
          %v525 = vld [vmem:[#allocation11 + $0x70] sm:$0xff]
          %v526 = vld [vmem:[#allocation11 + $0x78] sm:$0xff]
          %v527 = vld [vmem:[#allocation11 + $0x80] sm:$0xff]
          %v528 = vld [vmem:[#allocation11 + $0x88] sm:$0xff]
          %v529 = vld [vmem:[#allocation11 + $0x90] sm:$0xff]
          %v530 = vld [vmem:[#allocation11 + $0x98] sm:$0xff]
          %v531 = vld [vmem:[#allocation11 + $0xa0] sm:$0xff]
          %v532 = vld [vmem:[#allocation11 + $0xa8] sm:$0xff]
          %v533 = vld [vmem:[#allocation11 + $0xb0] sm:$0xff]
          %v534 = vld [vmem:[#allocation11 + $0xb8] sm:$0xff]
          %v535 = vld [vmem:[#allocation11 + $0xc0] sm:$0xff]
          %v536 = vld [vmem:[#allocation11 + $0xc8] sm:$0xff]
          %v537 = vld [vmem:[#allocation11 + $0xd0] sm:$0xff]
          %v538 = vld [vmem:[#allocation11 + $0xd8] sm:$0xff]
          %v539 = vld [vmem:[#allocation11 + $0xe0] sm:$0xff]
          %v540 = vld [vmem:[#allocation11 + $0xe8] sm:$0xff]
          %v541 = vld [vmem:[#allocation11 + $0xf0] sm:$0xff]
          %v542 = vld [vmem:[#allocation11 + $0xf8] sm:$0xff]
          %v543 = vld [vmem:[%s5] sm:$0x3]
          %v545 = vperm.slane %v543, 0
          %v546 = vperm.slane %v543, 1
          %vm551 = vcmask 1041409
          %v552 = vsel %vm551, %v510, %v509
          %554 = vmatpush.msra.mxu0 %v541
          %555 = vmatpush.msra.mxu0 %v539
          %556 = vmatpush.msra.mxu0 %v537
          %557 = vmatpush.msra.mxu0 %v535
          %558 = vmatpush.msra.mxu0 %v533
          %559 = vmatpush.msra.mxu0 %v531
          %560 = vmatpush.msra.mxu0 %v529
          %561 = vmatpush.msra.mxu0 %v527
          %562 = vmatpush.msra.mxu0 %v525
          %563 = vmatpush.msra.mxu0 %v523
          %564 = vmatpush.msra.mxu0 %v521
          %565 = vmatpush.msra.mxu0 %v519
          %566 = vmatpush.msra.mxu0 %v517
          %567 = vmatpush.msra.mxu0 %v515
          %568 = vmatpush.msra.mxu0 %v513
          %569 = vmatpush.msra.mxu0 %v511
          %570 = vmatmul.f32.gmra.mxu0 %v552
          %v571 = vpop.f32.mrf.mxu0
          %v572 = vadd.f32 %v545, %v571
          %573 = vdwg.mxu0
          %574 = vmatpush.msra.mxu0 %v542
          %575 = vmatpush.msra.mxu0 %v540
          %576 = vmatpush.msra.mxu0 %v538
          %577 = vmatpush.msra.mxu0 %v536
          %578 = vmatpush.msra.mxu0 %v534
          %579 = vmatpush.msra.mxu0 %v532
          %580 = vmatpush.msra.mxu0 %v530
          %581 = vmatpush.msra.mxu0 %v528
          %582 = vmatpush.msra.mxu0 %v526
          %583 = vmatpush.msra.mxu0 %v524
          %584 = vmatpush.msra.mxu0 %v522
          %585 = vmatpush.msra.mxu0 %v520
          %586 = vmatpush.msra.mxu0 %v518
          %587 = vmatpush.msra.mxu0 %v516
          %588 = vmatpush.msra.mxu0 %v514
          %589 = vmatpush.msra.mxu0 %v512
          %590 = vmatmul.f32.gmra.mxu0 %v552
          %v591 = vpop.f32.mrf.mxu0
          %v592 = vadd.f32 %v546, %v591
          %593 = vdwg.mxu0
          %v596 = vrot.slane %v592, 6
          %vm597 = vcmask 1041408
          %v598 = vsel %vm597, %v572, %v596
          %600 = vst [vmem:[#allocation2] sm:$0xf] %v598
        $region76: #{tpu_custom_call.1} parent=47 // pred_fallthru
          _
        %v601 = vld [vmem:[#allocation2] sm:$0xf]
        %v603 = vrot.slane %v601, 1
        %v604 = vrot.slane %v601, 2
        %v605 = vrot.slane %v601, 3
        %vm606 = vcmask 1040384
        %v607 = vsel %vm606, %v601, %v603
        %vm608 = vcmask 1042434
        %v609 = vsel %vm608, %v604, %v605
        %vm610 = vcmask 1041408
        %v611 = vsel %vm610, %v607, %v609
        %vm612 = vcmask 1041409
        %v613 = vsel %vm612, %v601, %v603
        %vm614 = vcmask 1043459
        %v615 = vsel %vm614, %v604, %v605
        %vm616 = vcmask 1042433
        %v617 = vsel %vm616, %v613, %v615
        %v618 = vrot.slane %v617, 1
        %v619 = vld [vmem:[%s411] sm:$0xff]
        %v620 = vld [vmem:[%s411 + $0x8] sm:$0xff]
        %v621 = vld [vmem:[%s411 + $0x10] sm:$0xff]
        %v622 = vld [vmem:[%s411 + $0x18] sm:$0xff]
        %v623 = vperm.slane %v611, 0
        %v624 = vperm.slane %v611, 1
        %v625 = vperm.slane %v618, 0
        %v626 = vperm.slane %v618, 1
        %v631 = vmul.f32 %v619, %v623
        %v632 = vmul.f32 %v620, %v624
        %v633 = vmul.f32 %v621, %v625
        %v634 = vmul.f32 %v622, %v626
        %635 = vst [vmem:[%s452] sm:$0xff] %v631
        %636 = vst [vmem:[%s452 + $0x8] sm:$0xff] %v632
        %637 = vst [vmem:[%s452 + $0x10] sm:$0xff] %v633
        %638 = vst [vmem:[%s452 + $0x18] sm:$0xff] %v634
        %s639 = sand.u32 %s217, 1
        %s640 = scalar_lea.sflag [#allocation5], %s639
        %s641 = sand.u32 %s217, 1
        %s642 = smul.addr %s641, 32
        %s643 = scalar_lea.vmem [#allocation14], %s642
        // Predicated region
        $region77: #{tpu_custom_call.1} parent=47 // pred_check
          %p644 = pneg %p227
        $region78: #{tpu_custom_call.1} parent=47 // pred_check_branch
          %646 = sbr.rel (%p644) target = $region80
        $region79: #{tpu_custom_call.1} parent=47 // pred_region
          %s647 = smul.u32 2, %s35
          %649 = vsyncadd %s640, 0
          %s650 = smul.addr %s36, 2
          %s651 = smul.addr %s647, 2
          %s652 = sadd.s32 %s650, %s651
          %s653 = smul.addr %s652, 8
          %s654 = scalar_lea.hbm %s7, %s653
          %s655 = sshll.u32 %s643, 4
          %s656 = int_to_ptr.vmem [resolvable:$true] %s655
          %s657 = sshll.u32 %s654, 4
          %s658 = int_to_ptr.hbm [resolvable:$true] %s657
          %663 = dma.vmem_to_hbm [thread:$0]  %s656, 512, %s658, %s640, 256, 256, 16
        $region80: #{tpu_custom_call.1} parent=47 // pred_fallthru
          _
      $region48: #{tpu_custom_call.1} parent=5 // pred_fallthru
        _
      %p664 = scmp.le.s32.totalorder 2, %s26
      // Predicated region
      $region81: #{tpu_custom_call.1} parent=5 // pred_check
        %p665 = pneg %p664
      $region82: #{tpu_custom_call.1} parent=5 // pred_check_branch
        %667 = sbr.rel (%p665) target = $region84
      $region83: #{tpu_custom_call.1} parent=5 // pred_region
        %s668 = ssub.s32 %s26, 2
        // Predicated region
        $region85: #{tpu_custom_call.1} parent=83 // pred_check
          %p669 = pneg %p233
        $region86: #{tpu_custom_call.1} parent=83 // pred_check_branch
          %671 = sbr.rel (%p669) target = $region88
        $region87: #{tpu_custom_call.1} parent=83 // pred_region
          %s672 = sand.u32 %s218, 1
          %s673 = scalar_lea.sflag [#allocation5], %s672
          %s674 = sand.u32 %s218, 1
          %s675 = smul.addr %s674, 32
          %s676 = scalar_lea.vmem [#allocation14], %s675
          %678 = dma.done %s673, 512
        $region88: #{tpu_custom_call.1} parent=83 // pred_fallthru
          _
      $region84: #{tpu_custom_call.1} parent=5 // pred_fallthru
        _
    $region6: #{tpu_custom_call.1} parent=1 // loop_footer
      %s30 = sadd.s32 1, %s26
    $region7: #{tpu_custom_call.1} parent=1 // loop_footer_branch
      %25 = sbr.rel target = $region3
    $region8: #{tpu_custom_call.1} parent=1 // loop_exit
      _
    %679 = vsyncpa [#allocation4], 1
    %s680 = scalar_lea.sflag [#allocation4], 1
    %681 = vsyncpa %s680, 1
    %682 = vsyncpa [#allocation7], 1
    %s683 = scalar_lea.sflag [#allocation7], 1
    %684 = vsyncpa %s683, 1
    %685 = vsyncpa [#allocation10], 1
    %686 = vsyncpa [#allocation13], 1
    %s687 = scalar_lea.sflag [#allocation13], 1
    %688 = vsyncpa %s687, 1
    %689 = vsyncpa [#allocation5], 1
    %s690 = scalar_lea.sflag [#allocation5], 1
    %691 = vsyncpa %s690, 1

// kernel: tpu_custom_call.1
$region0: #{tpu_custom_call.1}
  #allocation0 [shape = 'u32[]', space=smem, size = 0x4, offset = 0x4, fixed_abs, tag = 'smem constant byte address 0x4 - core index']
  #allocation1 [shape = 'u32[72,128]{1,0:T(1,128)}', space=vmem, size = 0x9000, scoped, tag = 'internal scratch']
  #allocation2 [shape = 'f32[2,256]{1,0:T(2,128)}', space=vmem, size = 0x800, scoped, tag = 'scratch operand']
  %s0 = inlined_call_operand.hbm [shape: f32[4,16,128], index: 0, kind: input, shape index: {}]
  %s1 = inlined_call_operand.hbm [shape: f32[4,16,128], index: 1, kind: input, shape index: {}]
  %s2 = inlined_call_operand.hbm [shape: f32[16,128], index: 2, kind: input, shape index: {}]
  %s3 = inlined_call_operand.hbm [shape: f32[16,128], index: 3, kind: input, shape index: {}]
  %s4 = inlined_call_operand.hbm [shape: f32[128,256], index: 4, kind: input, shape index: {}]
  %s5 = inlined_call_operand.vmem [shape: f32[1,256], index: 5, kind: input, shape index: {}]
  %s6 = inlined_call_operand.hbm [shape: f32[4,8,256], index: 6, kind: input, shape index: {}]
  %s7 = inlined_call_operand.hbm [shape: f32[4,8,256], index: 7, kind: output, shape index: {}]
  %s8 = sld [smem:[#allocation0]]
  $region89: #{tpu_custom_call.1} parent=0
    _
  %s10 = ssub.s32 1, %s8
  %s11 = scalar_select 0, %s10, %s8
  $region1: #{tpu_custom_call.1} parent=0
    #allocation3 [shape = 'u8[32768]{0}', space=vmem, size = 0x8000, scoped, tag = 'input window, operand 0']
    #allocation4 [shape = 's32[2]{0}', space=sflag, size = 0x8, scoped, tag = 'scoped memory for tpu_custom_call.1']
    #allocation5 [shape = 's32[2]{0}', space=sflag, size = 0x8, scoped, tag = 'scoped memory for tpu_custom_call.1']
    #allocation6 [shape = 'u8[32768]{0}', space=vmem, size = 0x8000, scoped, tag = 'input window, operand 1']
    #allocation7 [shape = 's32[2]{0}', space=sflag, size = 0x8, scoped, tag = 'scoped memory for tpu_custom_call.1']
    #allocation8 [shape = 'u8[8192]{0}', space=vmem, size = 0x2000, scoped, tag = 'input window, operand 2, single buffered']
    #allocation9 [shape = 'u8[8192]{0}', space=vmem, size = 0x2000, scoped, tag = 'input window, operand 3, single buffered']
    #allocation10 [shape = 's32[1]{0}', space=sflag, size = 0x4, scoped, tag = 'scoped memory for tpu_custom_call.1']
    #allocation11 [shape = 'u8[131072]{0}', space=vmem, size = 0x20000, scoped, tag = 'input window, operand 4, single buffered']
    #allocation12 [shape = 'u8[32768]{0}', space=vmem, size = 0x8000, scoped, tag = 'input window, operand 6']
    #allocation13 [shape = 's32[2]{0}', space=sflag, size = 0x8, scoped, tag = 'scoped memory for tpu_custom_call.1']
    #allocation14 [shape = 'u8[32768]{0}', space=vmem, size = 0x8000, scoped, tag = 'output window, operand 0']
    %12 = vsyncpa [#allocation4], 0
    %s13 = scalar_lea.sflag [#allocation4], 1
    %14 = vsyncpa %s13, 0
    %15 = vsyncpa [#allocation7], 0
    %s16 = scalar_lea.sflag [#allocation7], 1
    %17 = vsyncpa %s16, 0
    %18 = vsyncpa [#allocation10], 0
    %19 = vsyncpa [#allocation13], 0
    %s20 = scalar_lea.sflag [#allocation13], 1
    %21 = vsyncpa %s20, 0
    %22 = vsyncpa [#allocation5], 0
    %s23 = scalar_lea.sflag [#allocation5], 1
    %24 = vsyncpa %s23, 0
    loop: start=0, step=1, limit=4
    $region2: #{tpu_custom_call.1} parent=1 // loop_pre_header
      _
    $region3: #{tpu_custom_call.1} parent=1 // loop_header
      %s26 = sphi 0, %s30
      %p27 = scmp.ge.s32.totalorder %s26, 4
      %s33 = sphi 0, %s45
      %s34 = sphi 0, %s41
      %s35 = sphi 0, %s33
      %s36 = sphi 0, %s34
      %s37 = sphi 0, %s35
      %s38 = sphi 0, %s36
      %s48 = sphi 0, %s50
      %s51 = sphi 0, %s48
      %s52 = sphi 0, %s51
      %s68 = sphi 0, %s52
      %s74 = sphi 0, %s76
      %s77 = sphi 0, %s74
      %s78 = sphi 0, %s77
      %s94 = sphi 0, %s78
      %s98 = sphi 0, %s98
      %s100 = sphi 0, %s98
      %s101 = sphi 0, %s100
      %s115 = sphi 0, %s101
      %s119 = sphi 0, %s119
      %s121 = sphi 0, %s119
      %s122 = sphi 0, %s121
      %s136 = sphi 0, %s122
      %s140 = sphi 0, %s140
      %s142 = sphi 0, %s140
      %s143 = sphi 0, %s142
      %s157 = sphi 0, %s143
      %s161 = sphi 0, %s161
      %s163 = sphi 0, %s161
      %s164 = sphi 0, %s163
      %s178 = sphi 0, %s164
      %s186 = sphi 0, %s188
      %s189 = sphi 0, %s186
      %s190 = sphi 0, %s189
      %s206 = sphi 0, %s190
      %s214 = sphi 0, %s216
      %s217 = sphi 0, %s214
      %s218 = sphi 0, %s217
      %s234 = sphi 0, %s218
    $region4: #{tpu_custom_call.1} parent=1 // loop_header_branch
      %29 = sbr.rel (%p27) target = $region8
    $region5: #{tpu_custom_call.1} parent=1 // loop_body
      %s31 = ssub.s32 %s26, 1
      %s32 = ssub.s32 %s26, 2
      %s39 = sadd.s32 1, %s34
      %p40 = scmp.ge.s32.totalorder %s39, 1
      %s41 = scalar_select %p40, 0, %s39
      %s42 = sadd.s32 1, %s33
      %s43 = scalar_select %p40, %s42, %s33
      %p44 = scmp.ge.s32.totalorder %s43, 2
      %s45 = scalar_select %p44, 0, %s43
      %s46 = ssub.s32 %s33, %s45
      %p47 = scmp.eq.s32.totalorder %s46, 0
      %s49 = sadd.s32 %s48, 1
      %s50 = scalar_select %p47, %s48, %s49
      %p53 = pneg %p47
      %p54 = scmp.eq.s32.totalorder %s26, 1
      %p55 = por %p53, %p54
      %p56 = scmp.ne.s32.totalorder %s48, %s51
      %p57 = scmp.eq.s32.totalorder %s26, 0
      %p58 = por %p56, %p57
      %p59 = scmp.ne.s32.totalorder %s48, %s51
      %p60 = scmp.eq.s32.totalorder %s31, 1
      %p61 = por %p59, %p60
      %p62 = scmp.ne.s32.totalorder %s51, %s52
      %p63 = scmp.eq.s32.totalorder %s31, 0
      %p64 = por %p62, %p63
      %p65 = scmp.ne.s32.totalorder %s51, %s52
      %p66 = scmp.eq.s32.totalorder %s32, 1
      %p67 = por %p65, %p66
      %p69 = scmp.ne.s32.totalorder %s52, %s68
      %p70 = scmp.eq.s32.totalorder %s32, 0
      %p71 = por %p69, %p70
      %s72 = ssub.s32 %s33, %s45
      %p73 = scmp.eq.s32.totalorder %s72, 0
      %s75 = sadd.s32 %s74, 1
      %s76 = scalar_select %p73, %s74, %s75
      %p79 = pneg %p73
      %p80 = scmp.eq.s32.totalorder %s26, 1
      %p81 = por %p79, %p80
      %p82 = scmp.ne.s32.totalorder %s74, %s77
      %p83 = scmp.eq.s32.totalorder %s26, 0
      %p84 = por %p82, %p83
      %p85 = scmp.ne.s32.totalorder %s74, %s77
      %p86 = scmp.eq.s32.totalorder %s31, 1
      %p87 = por %p85, %p86
      %p88 = scmp.ne.s32.totalorder %s77, %s78
      %p89 = scmp.eq.s32.totalorder %s31, 0
      %p90 = por %p88, %p89
      %p91 = scmp.ne.s32.totalorder %s77, %s78
      %p92 = scmp.eq.s32.totalorder %s32, 1
      %p93 = por %p91, %p92
      %p95 = scmp.ne.s32.totalorder %s78, %s94
      %p96 = scmp.eq.s32.totalorder %s32, 0
      %p97 = por %p95, %p96
      %s99 = sadd.s32 %s98, 1
      %p102 = scmp.eq.s32.totalorder %s26, 1
      %p103 = scmp.ne.s32.totalorder %s98, %s100
      %p104 = scmp.eq.s32.totalorder %s26, 0
      %p105 = por %p103, %p104
      %p106 = scmp.ne.s32.totalorder %s98, %s100
      %p107 = scmp.eq.s32.totalorder %s31, 1
      %p108 = por %p106, %p107
      %p109 = scmp.ne.s32.totalorder %s100, %s101
      %p110 = scmp.eq.s32.totalorder %s31, 0
      %p111 = por %p109, %p110
      %p112 = scmp.ne.s32.totalorder %s100, %s101
      %p113 = scmp.eq.s32.totalorder %s32, 1
      %p114 = por %p112, %p113
      %p116 = scmp.ne.s32.totalorder %s101, %s115
      %p117 = scmp.eq.s32.totalorder %s32, 0
      %p118 = por %p116, %p117
      %s120 = sadd.s32 %s119, 1
      %p123 = scmp.eq.s32.totalorder %s26, 1
      %p124 = scmp.ne.s32.totalorder %s119, %s121
      %p125 = scmp.eq.s32.totalorder %s26, 0
      %p126 = por %p124, %p125
      %p127 = scmp.ne.s32.totalorder %s119, %s121
      %p128 = scmp.eq.s32.totalorder %s31, 1
      %p129 = por %p127, %p128
      %p130 = scmp.ne.s32.totalorder %s121, %s122
      %p131 = scmp.eq.s32.totalorder %s31, 0
      %p132 = por %p130, %p131
      %p133 = scmp.ne.s32.totalorder %s121, %s122
      %p134 = scmp.eq.s32.totalorder %s32, 1
      %p135 = por %p133, %p134
      %p137 = scmp.ne.s32.totalorder %s122, %s136
      %p138 = scmp.eq.s32.totalorder %s32, 0
      %p139 = por %p137, %p138
      %s141 = sadd.s32 %s140, 1
      %p144 = scmp.eq.s32.totalorder %s26, 1
      %p145 = scmp.ne.s32.totalorder %s140, %s142
      %p146 = scmp.eq.s32.totalorder %s26, 0
      %p147 = por %p145, %p146
      %p148 = scmp.ne.s32.totalorder %s140, %s142
      %p149 = scmp.eq.s32.totalorder %s31, 1
      %p150 = por %p148, %p149
      %p151 = scmp.ne.s32.totalorder %s142, %s143
      %p152 = scmp.eq.s32.totalorder %s31, 0
      %p153 = por %p151, %p152
      %p154 = scmp.ne.s32.totalorder %s142, %s143
      %p155 = scmp.eq.s32.totalorder %s32, 1
      %p156 = por %p154, %p155
      %p158 = scmp.ne.s32.totalorder %s143, %s157
      %p159 = scmp.eq.s32.totalorder %s32, 0
      %p160 = por %p158, %p159
      %s162 = sadd.s32 %s161, 1
      %p165 = scmp.eq.s32.totalorder %s26, 1
      %p166 = scmp.ne.s32.totalorder %s161, %s163
      %p167 = scmp.eq.s32.totalorder %s26, 0
      %p168 = por %p166, %p167
      %p169 = scmp.ne.s32.totalorder %s161, %s163
      %p170 = scmp.eq.s32.totalorder %s31, 1
      %p171 = por %p169, %p170
      %p172 = scmp.ne.s32.totalorder %s163, %s164
      %p173 = scmp.eq.s32.totalorder %s31, 0
      %p174 = por %p172, %p173
      %p175 = scmp.ne.s32.totalorder %s163, %s164
      %p176 = scmp.eq.s32.totalorder %s32, 1
      %p177 = por %p175, %p176
      %p179 = scmp.ne.s32.totalorder %s164, %s178
      %p180 = scmp.eq.s32.totalorder %s32, 0
      %p181 = por %p179, %p180
      %s182 = ssub.s32 %s33, %s45
      %s183 = ssub.s32 %s34, %s41
      %s184 = sor.u32 %s182, %s183
      %p185 = scmp.eq.s32.totalorder %s184, 0
      %s187 = sadd.s32 %s186, 1
      %s188 = scalar_select %p185, %s186, %s187
      %p191 = pneg %p185
      %p192 = scmp.eq.s32.totalorder %s26, 1
      %p193 = por %p191, %p192
      %p194 = scmp.ne.s32.totalorder %s186, %s189
      %p195 = scmp.eq.s32.totalorder %s26, 0
      %p196 = por %p194, %p195
      %p197 = scmp.ne.s32.totalorder %s186, %s189
      %p198 = scmp.eq.s32.totalorder %s31, 1
      %p199 = por %p197, %p198
      %p200 = scmp.ne.s32.totalorder %s189, %s190
      %p201 = scmp.eq.s32.totalorder %s31, 0
      %p202 = por %p200, %p201
      %p203 = scmp.ne.s32.totalorder %s189, %s190
      %p204 = scmp.eq.s32.totalorder %s32, 1
      %p205 = por %p203, %p204
      %p207 = scmp.ne.s32.totalorder %s190, %s206
      %p208 = scmp.eq.s32.totalorder %s32, 0
      %p209 = por %p207, %p208
      %s210 = ssub.s32 %s33, %s45
      %s211 = ssub.s32 %s34, %s41
      %s212 = sor.u32 %s210, %s211
      %p213 = scmp.eq.s32.totalorder %s212, 0
      %s215 = sadd.s32 %s214, 1
      %s216 = scalar_select %p213, %s214, %s215
      %p219 = pneg %p213
      %p220 = scmp.eq.s32.totalorder %s26, 1
      %p221 = por %p219, %p220
      %p222 = scmp.ne.s32.totalorder %s214, %s217
      %p223 = scmp.eq.s32.totalorder %s26, 0
      %p224 = por %p222, %p223
      %p225 = scmp.ne.s32.totalorder %s214, %s217
      %p226 = scmp.eq.s32.totalorder %s31, 1
      %p227 = por %p225, %p226
      %p228 = scmp.ne.s32.totalorder %s217, %s218
      %p229 = scmp.eq.s32.totalorder %s31, 0
      %p230 = por %p228, %p229
      %p231 = scmp.ne.s32.totalorder %s217, %s218
      %p232 = scmp.eq.s32.totalorder %s32, 1
      %p233 = por %p231, %p232
      %p235 = scmp.ne.s32.totalorder %s218, %s234
      %p236 = scmp.eq.s32.totalorder %s32, 0
      %p237 = por %p235, %p236
      %p238 = scmp.le.s32.totalorder 1, %s26
      %p239 = scmp.lt.s32.totalorder %s26, 3
      %p240 = pnand %p238, %p239
      %p241 = pneg %p240
      // Predicated region
      $region9: #{tpu_custom_call.1} parent=5 // pred_check
        _
      $region10: #{tpu_custom_call.1} parent=5 // pred_check_branch
        %243 = sbr.rel (%p240) target = $region12
      $region11: #{tpu_custom_call.1} parent=5 // pred_region
        %s244 = ssub.s32 %s26, 1
        // Predicated region
        $region13: #{tpu_custom_call.1} parent=11 // pred_check
          %p245 = pneg %p111
        $region14: #{tpu_custom_call.1} parent=11 // pred_check_branch
          %247 = sbr.rel (%p245) target = $region16
        $region15: #{tpu_custom_call.1} parent=11 // pred_region
          %249 = vsyncadd [#allocation7], 0
          %s250 = sshll.u32 %s2, 4
          %s251 = int_to_ptr.hbm [resolvable:$true] %s250
          %s252 = sshll.u32 [#allocation8], 4
          %s253 = int_to_ptr.vmem [resolvable:$true] %s252
          %258 = dma.hbm_to_vmem [thread:$0]  %s251, 256, %s253, [#allocation7], 128, 128, 8
        $region16: #{tpu_custom_call.1} parent=11 // pred_fallthru
          _
        // Predicated region
        $region17: #{tpu_custom_call.1} parent=11 // pred_check
          %p259 = pneg %p132
        $region18: #{tpu_custom_call.1} parent=11 // pred_check_branch
          %261 = sbr.rel (%p259) target = $region20
        $region19: #{tpu_custom_call.1} parent=11 // pred_region
          %263 = vsyncadd [#allocation10], 0
          %s264 = sshll.u32 %s3, 4
          %s265 = int_to_ptr.hbm [resolvable:$true] %s264
          %s266 = sshll.u32 [#allocation9], 4
          %s267 = int_to_ptr.vmem [resolvable:$true] %s266
          %272 = dma.hbm_to_vmem [thread:$0]  %s265, 256, %s267, [#allocation10], 128, 128, 8
        $region20: #{tpu_custom_call.1} parent=11 // pred_fallthru
          _
        // Predicated region
        $region21: #{tpu_custom_call.1} parent=11 // pred_check
          %p273 = pneg %p153
        $region22: #{tpu_custom_call.1} parent=11 // pred_check_branch
          %275 = sbr.rel (%p273) target = $region24
        $region23: #{tpu_custom_call.1} parent=11 // pred_region
          %277 = vsyncadd [#allocation10], 0
          %s278 = sshll.u32 %s4, 4
          %s279 = int_to_ptr.hbm [resolvable:$true] %s278
          %s280 = sshll.u32 [#allocation11], 4
          %s281 = int_to_ptr.vmem [resolvable:$true] %s280
          %286 = dma.hbm_to_vmem [thread:$0]  %s279, 4096, %s281, [#allocation10], 256, 256, 16
        $region24: #{tpu_custom_call.1} parent=11 // pred_fallthru
          _
        // Predicated region
        $region25: #{tpu_custom_call.1} parent=11 // pred_check
          %p287 = pneg %p174
        $region26: #{tpu_custom_call.1} parent=11 // pred_check_branch
          %289 = sbr.rel (%p287) target = $region28
        $region27: #{tpu_custom_call.1} parent=11 // pred_region
          _
        $region28: #{tpu_custom_call.1} parent=11 // pred_fallthru
          _
      $region12: #{tpu_custom_call.1} parent=5 // pred_fallthru
        _
      %p290 = scmp.lt.s32.totalorder %s26, 2
      // Predicated region
      $region29: #{tpu_custom_call.1} parent=5 // pred_check
        %p291 = pneg %p290
      $region30: #{tpu_custom_call.1} parent=5 // pred_check_branch
        %293 = sbr.rel (%p291) target = $region32
      $region31: #{tpu_custom_call.1} parent=5 // pred_region
        // Predicated region
        $region33: #{tpu_custom_call.1} parent=31 // pred_check
          %p294 = pneg %p58
        $region34: #{tpu_custom_call.1} parent=31 // pred_check_branch
          %296 = sbr.rel (%p294) target = $region36
        $region35: #{tpu_custom_call.1} parent=31 // pred_region
          %s297 = sand.u32 %s48, 1
          %s298 = scalar_lea.sflag [#allocation4], %s297
          %s299 = sand.u32 %s48, 1
          %s300 = smul.addr %s299, 32
          %s301 = scalar_lea.vmem [#allocation3], %s300
          %s302 = smul.u32 2, %s33
          %304 = vsyncadd %s298, 0
          %s305 = smul.addr %s302, 2
          %s306 = smul.addr %s305, 8
          %s307 = scalar_lea.hbm %s0, %s306
          %s308 = sshll.u32 %s307, 4
          %s309 = int_to_ptr.hbm [resolvable:$true] %s308
          %s310 = sshll.u32 %s301, 4
          %s311 = int_to_ptr.vmem [resolvable:$true] %s310
          %316 = dma.hbm_to_vmem [thread:$0]  %s309, 512, %s311, %s298, 128, 128, 8
        $region36: #{tpu_custom_call.1} parent=31 // pred_fallthru
          _
        // Predicated region
        $region37: #{tpu_custom_call.1} parent=31 // pred_check
          %p317 = pneg %p84
        $region38: #{tpu_custom_call.1} parent=31 // pred_check_branch
          %319 = sbr.rel (%p317) target = $region40
        $region39: #{tpu_custom_call.1} parent=31 // pred_region
          %s320 = sand.u32 %s26, 1
          %s321 = scalar_lea.sflag [#allocation7], %s320
          %s322 = sand.u32 %s74, 1
          %s323 = smul.addr %s322, 32
          %s324 = scalar_lea.vmem [#allocation6], %s323
          %s325 = smul.u32 2, %s33
          %327 = vsyncadd %s321, 0
          %s328 = smul.addr %s325, 2
          %s329 = smul.addr %s328, 8
          %s330 = scalar_lea.hbm %s1, %s329
          %s331 = sshll.u32 %s330, 4
          %s332 = int_to_ptr.hbm [resolvable:$true] %s331
          %s333 = sshll.u32 %s324, 4
          %s334 = int_to_ptr.vmem [resolvable:$true] %s333
          %339 = dma.hbm_to_vmem [thread:$0]  %s332, 512, %s334, %s321, 128, 128, 8
        $region40: #{tpu_custom_call.1} parent=31 // pred_fallthru
          _
        // Predicated region
        $region41: #{tpu_custom_call.1} parent=31 // pred_check
          %p340 = pneg %p196
        $region42: #{tpu_custom_call.1} parent=31 // pred_check_branch
          %342 = sbr.rel (%p340) target = $region44
        $region43: #{tpu_custom_call.1} parent=31 // pred_region
          %s343 = sand.u32 %s186, 1
          %s344 = scalar_lea.sflag [#allocation13], %s343
          %s345 = sand.u32 %s186, 1
          %s346 = smul.addr %s345, 32
          %s347 = scalar_lea.vmem [#allocation12], %s346
          %s348 = smul.u32 2, %s33
          %350 = vsyncadd %s344, 0
          %s351 = smul.addr %s34, 2
          %s352 = smul.addr %s348, 2
          %s353 = sadd.s32 %s351, %s352
          %s354 = smul.addr %s353, 8
          %s355 = scalar_lea.hbm %s6, %s354
          %s356 = sshll.u32 %s355, 4
          %s357 = int_to_ptr.hbm [resolvable:$true] %s356
          %s358 = sshll.u32 %s347, 4
          %s359 = int_to_ptr.vmem [resolvable:$true] %s358
          %364 = dma.hbm_to_vmem [thread:$0]  %s357, 512, %s359, %s344, 256, 256, 16
        $region44: #{tpu_custom_call.1} parent=31 // pred_fallthru
          _
      $region32: #{tpu_custom_call.1} parent=5 // pred_fallthru
        _
      %p365 = scmp.le.s32.totalorder 1, %s26
      %p366 = scmp.lt.s32.totalorder %s26, 3
      %p367 = pnand %p365, %p366
      %p368 = pneg %p367
      // Predicated region
      $region45: #{tpu_custom_call.1} parent=5 // pred_check
        _
      $region46: #{tpu_custom_call.1} parent=5 // pred_check_branch
        %370 = sbr.rel (%p367) target = $region48
      $region47: #{tpu_custom_call.1} parent=5 // pred_region
        %s371 = ssub.s32 %s26, 1
        %s372 = sand.u32 %s51, 1
        %s373 = scalar_lea.sflag [#allocation4], %s372
        %s374 = sand.u32 %s51, 1
        %s375 = smul.addr %s374, 32
        %s376 = scalar_lea.vmem [#allocation3], %s375
        // Predicated region
        $region49: #{tpu_custom_call.1} parent=47 // pred_check
          %p377 = pneg %p64
        $region50: #{tpu_custom_call.1} parent=47 // pred_check_branch
          %379 = sbr.rel (%p377) target = $region52
        $region51: #{tpu_custom_call.1} parent=47 // pred_region
          %381 = dma.done %s373, 512
        $region52: #{tpu_custom_call.1} parent=47 // pred_fallthru
          _
        %s382 = sand.u32 %s31, 1
        %s383 = scalar_lea.sflag [#allocation7], %s382
        %s384 = sand.u32 %s77, 1
        %s385 = smul.addr %s384, 32
        %s386 = scalar_lea.vmem [#allocation6], %s385
        // Predicated region
        $region53: #{tpu_custom_call.1} parent=47 // pred_check
          %p387 = pneg %p90
        $region54: #{tpu_custom_call.1} parent=47 // pred_check_branch
          %389 = sbr.rel (%p387) target = $region56
        $region55: #{tpu_custom_call.1} parent=47 // pred_region
          %391 = dma.done %s383, 512
        $region56: #{tpu_custom_call.1} parent=47 // pred_fallthru
          _
        // Predicated region
        $region57: #{tpu_custom_call.1} parent=47 // pred_check
          %p392 = pneg %p111
        $region58: #{tpu_custom_call.1} parent=47 // pred_check_branch
          %394 = sbr.rel (%p392) target = $region60
        $region59: #{tpu_custom_call.1} parent=47 // pred_region
          %396 = dma.done [#allocation7], 256
        $region60: #{tpu_custom_call.1} parent=47 // pred_fallthru
          _
        // Predicated region
        $region61: #{tpu_custom_call.1} parent=47 // pred_check
          %p397 = pneg %p132
        $region62: #{tpu_custom_call.1} parent=47 // pred_check_branch
          %399 = sbr.rel (%p397) target = $region64
        $region63: #{tpu_custom_call.1} parent=47 // pred_region
          %401 = dma.done [#allocation10], 256
        $region64: #{tpu_custom_call.1} parent=47 // pred_fallthru
          _
        // Predicated region
        $region65: #{tpu_custom_call.1} parent=47 // pred_check
          %p402 = pneg %p153
        $region66: #{tpu_custom_call.1} parent=47 // pred_check_branch
          %404 = sbr.rel (%p402) target = $region68
        $region67: #{tpu_custom_call.1} parent=47 // pred_region
          %406 = dma.done [#allocation10], 4096
        $region68: #{tpu_custom_call.1} parent=47 // pred_fallthru
          _
        %s407 = sand.u32 %s189, 1
        %s408 = scalar_lea.sflag [#allocation13], %s407
        %s409 = sand.u32 %s189, 1
        %s410 = smul.addr %s409, 32
        %s411 = scalar_lea.vmem [#allocation12], %s410
        // Predicated region
        $region69: #{tpu_custom_call.1} parent=47 // pred_check
          %p412 = pneg %p202
        $region70: #{tpu_custom_call.1} parent=47 // pred_check_branch
          %414 = sbr.rel (%p412) target = $region72
        $region71: #{tpu_custom_call.1} parent=47 // pred_region
          %416 = dma.done %s408, 512
        $region72: #{tpu_custom_call.1} parent=47 // pred_fallthru
          _
        %s417 = sand.u32 %s51, 1
        %s418 = scalar_lea.sflag [#allocation4], %s417
        %s419 = sand.u32 %s51, 1
        %s420 = smul.addr %s419, 32
        %s421 = scalar_lea.vmem [#allocation3], %s420
        %p422 = pneg %p64
        %p423 = pneg %p61
        %s424 = sand.u32 %s31, 1
        %s425 = scalar_lea.sflag [#allocation7], %s424
        %s426 = sand.u32 %s77, 1
        %s427 = smul.addr %s426, 32
        %s428 = scalar_lea.vmem [#allocation6], %s427
        %p429 = pneg %p90
        %p430 = pneg %p87
        %p431 = pneg %p111
        %p432 = pneg %p108
        %p433 = pneg %p132
        %p434 = pneg %p129
        %p435 = pneg %p153
        %p436 = pneg %p150
        %p437 = pneg %p174
        %p438 = pneg %p171
        %s439 = sand.u32 %s189, 1
        %s440 = scalar_lea.sflag [#allocation13], %s439
        %s441 = sand.u32 %s189, 1
        %s442 = smul.addr %s441, 32
        %s443 = scalar_lea.vmem [#allocation12], %s442
        %p444 = pneg %p202
        %p445 = pneg %p199
        %p446 = pneg %p230
        %p447 = pneg %p227
        %s448 = sand.u32 %s217, 1
        %s449 = scalar_lea.sflag [#allocation5], %s448
        %s450 = sand.u32 %s217, 1
        %s451 = smul.addr %s450, 32
        %s452 = scalar_lea.vmem [#allocation14], %s451
        %s453 = smul.u32 2, %s35
        %s454 = smul.u32 2, %s35
        %s455 = smul.u32 2, %s35
        %s456 = smul.u32 2, %s35
        %p457 = scmp.eq.s32.totalorder %s36, 0
        // Predicated region
        $region73: #{tpu_custom_call.1} parent=47 // pred_check
          %p458 = pneg %p457
        $region74: #{tpu_custom_call.1} parent=47 // pred_check_branch
          %460 = sbr.rel (%p458) target = $region76
        $region75: #{tpu_custom_call.1} parent=47 // pred_region
          %v461 = vld [vmem:[%s376] sm:$0xff]
          %v462 = vld [vmem:[%s376 + $0x8] sm:$0xff]
          %v463 = vld [vmem:[%s376 + $0x10] sm:$0xff]
          %v464 = vld [vmem:[%s376 + $0x18] sm:$0xff]
          %v465 = vld [vmem:[#allocation8] sm:$0xff]
          %v466 = vld [vmem:[#allocation8 + $0x8] sm:$0xff]
          %v467 = vmul.f32 %v461, %v465
          %v468 = vmul.f32 %v462, %v466
          %v469 = vmul.f32 %v463, %v465
          %v470 = vmul.f32 %v464, %v466
          %v471 = vadd.f32 %v467, %v468
          %v472 = vrot.slane %v471, 4
          %v473 = vadd.f32 %v471, %v472
          %v474 = vrot.slane %v473, 2
          %v475 = vadd.f32 %v473, %v474
          %v476 = vrot.slane %v475, 1
          %v477 = vadd.f32 %v475, %v476
          %v478 = vadd.f32 %v469, %v470
          %v479 = vrot.slane %v478, 4
          %v480 = vadd.f32 %v478, %v479
          %v481 = vrot.slane %v480, 2
          %v482 = vadd.f32 %v480, %v481
          %v483 = vrot.slane %v482, 1
          %v484 = vadd.f32 %v482, %v483
          %v485 = vld [vmem:[%s386] sm:$0xff]
          %v486 = vld [vmem:[%s386 + $0x8] sm:$0xff]
          %v487 = vld [vmem:[%s386 + $0x10] sm:$0xff]
          %v488 = vld [vmem:[%s386 + $0x18] sm:$0xff]
          %v489 = vld [vmem:[#allocation9] sm:$0xff]
          %v490 = vld [vmem:[#allocation9 + $0x8] sm:$0xff]
          %v491 = vmul.f32 %v485, %v489
          %v492 = vmul.f32 %v486, %v490
          %v493 = vmul.f32 %v487, %v489
          %v494 = vmul.f32 %v488, %v490
          %v495 = vadd.f32 %v491, %v492
          %v496 = vrot.slane %v495, 4
          %v497 = vadd.f32 %v495, %v496
          %v498 = vrot.slane %v497, 2
          %v499 = vadd.f32 %v497, %v498
          %v500 = vrot.slane %v499, 1
          %v501 = vadd.f32 %v499, %v500
          %v502 = vadd.f32 %v493, %v494
          %v503 = vrot.slane %v502, 4
          %v504 = vadd.f32 %v502, %v503
          %v505 = vrot.slane %v504, 2
          %v506 = vadd.f32 %v504, %v505
          %v507 = vrot.slane %v506, 1
          %v508 = vadd.f32 %v506, %v507
          %v509 = vsub.f32 %v477, %v501
          %v510 = vsub.f32 %v484, %v508
          %v511 = vld [vmem:[#allocation11] sm:$0xff]
          %v512 = vld [vmem:[#allocation11 + $0x8] sm:$0xff]
          %v513 = vld [vmem:[#allocation11 + $0x10] sm:$0xff]
          %v514 = vld [vmem:[#allocation11 + $0x18] sm:$0xff]
          %v515 = vld [vmem:[#allocation11 + $0x20] sm:$0xff]
          %v516 = vld [vmem:[#allocation11 + $0x28] sm:$0xff]
          %v517 = vld [vmem:[#allocation11 + $0x30] sm:$0xff]
          %v518 = vld [vmem:[#allocation11 + $0x38] sm:$0xff]
          %v519 = vld [vmem:[#allocation11 + $0x40] sm:$0xff]
          %v520 = vld [vmem:[#allocation11 + $0x48] sm:$0xff]
          %v521 = vld [vmem:[#allocation11 + $0x50] sm:$0xff]
          %v522 = vld [vmem:[#allocation11 + $0x58] sm:$0xff]
          %v523 = vld [vmem:[#allocation11 + $0x60] sm:$0xff]
          %v524 = vld [vmem:[#allocation11 + $0x68] sm:$0xff]
          %v525 = vld [vmem:[#allocation11 + $0x70] sm:$0xff]
          %v526 = vld [vmem:[#allocation11 + $0x78] sm:$0xff]
          %v527 = vld [vmem:[#allocation11 + $0x80] sm:$0xff]
          %v528 = vld [vmem:[#allocation11 + $0x88] sm:$0xff]
          %v529 = vld [vmem:[#allocation11 + $0x90] sm:$0xff]
          %v530 = vld [vmem:[#allocation11 + $0x98] sm:$0xff]
          %v531 = vld [vmem:[#allocation11 + $0xa0] sm:$0xff]
          %v532 = vld [vmem:[#allocation11 + $0xa8] sm:$0xff]
          %v533 = vld [vmem:[#allocation11 + $0xb0] sm:$0xff]
          %v534 = vld [vmem:[#allocation11 + $0xb8] sm:$0xff]
          %v535 = vld [vmem:[#allocation11 + $0xc0] sm:$0xff]
          %v536 = vld [vmem:[#allocation11 + $0xc8] sm:$0xff]
          %v537 = vld [vmem:[#allocation11 + $0xd0] sm:$0xff]
          %v538 = vld [vmem:[#allocation11 + $0xd8] sm:$0xff]
          %v539 = vld [vmem:[#allocation11 + $0xe0] sm:$0xff]
          %v540 = vld [vmem:[#allocation11 + $0xe8] sm:$0xff]
          %v541 = vld [vmem:[#allocation11 + $0xf0] sm:$0xff]
          %v542 = vld [vmem:[#allocation11 + $0xf8] sm:$0xff]
          %v543 = vld [vmem:[%s5] sm:$0x3]
          %v545 = vperm.slane %v543, 0
          %v546 = vperm.slane %v543, 1
          %vm551 = vcmask 1041409
          %v552 = vsel %vm551, %v510, %v509
          %554 = vmatpush.msra.mxu0 %v541
          %555 = vmatpush.msra.mxu0 %v539
          %556 = vmatpush.msra.mxu0 %v537
          %557 = vmatpush.msra.mxu0 %v535
          %558 = vmatpush.msra.mxu0 %v533
          %559 = vmatpush.msra.mxu0 %v531
          %560 = vmatpush.msra.mxu0 %v529
          %561 = vmatpush.msra.mxu0 %v527
          %562 = vmatpush.msra.mxu0 %v525
          %563 = vmatpush.msra.mxu0 %v523
          %564 = vmatpush.msra.mxu0 %v521
          %565 = vmatpush.msra.mxu0 %v519
          %566 = vmatpush.msra.mxu0 %v517
          %567 = vmatpush.msra.mxu0 %v515
          %568 = vmatpush.msra.mxu0 %v513
          %569 = vmatpush.msra.mxu0 %v511
          %570 = vmatmul.f32.gmra.mxu0 %v552
          %v571 = vpop.f32.mrf.mxu0
          %v572 = vadd.f32 %v545, %v571
          %573 = vdwg.mxu0
          %574 = vmatpush.msra.mxu0 %v542
          %575 = vmatpush.msra.mxu0 %v540
          %576 = vmatpush.msra.mxu0 %v538
          %577 = vmatpush.msra.mxu0 %v536
          %578 = vmatpush.msra.mxu0 %v534
          %579 = vmatpush.msra.mxu0 %v532
          %580 = vmatpush.msra.mxu0 %v530
          %581 = vmatpush.msra.mxu0 %v528
          %582 = vmatpush.msra.mxu0 %v526
          %583 = vmatpush.msra.mxu0 %v524
          %584 = vmatpush.msra.mxu0 %v522
          %585 = vmatpush.msra.mxu0 %v520
          %586 = vmatpush.msra.mxu0 %v518
          %587 = vmatpush.msra.mxu0 %v516
          %588 = vmatpush.msra.mxu0 %v514
          %589 = vmatpush.msra.mxu0 %v512
          %590 = vmatmul.f32.gmra.mxu0 %v552
          %v591 = vpop.f32.mrf.mxu0
          %v592 = vadd.f32 %v546, %v591
          %593 = vdwg.mxu0
          %v596 = vrot.slane %v592, 6
          %vm597 = vcmask 1041408
          %v598 = vsel %vm597, %v572, %v596
          %600 = vst [vmem:[#allocation2] sm:$0xf] %v598
        $region76: #{tpu_custom_call.1} parent=47 // pred_fallthru
          _
        %v601 = vld [vmem:[#allocation2] sm:$0xf]
        %v603 = vrot.slane %v601, 1
        %v604 = vrot.slane %v601, 2
        %v605 = vrot.slane %v601, 3
        %vm606 = vcmask 1040384
        %v607 = vsel %vm606, %v601, %v603
        %vm608 = vcmask 1042434
        %v609 = vsel %vm608, %v604, %v605
        %vm610 = vcmask 1041408
        %v611 = vsel %vm610, %v607, %v609
        %vm612 = vcmask 1041409
        %v613 = vsel %vm612, %v601, %v603
        %vm614 = vcmask 1043459
        %v615 = vsel %vm614, %v604, %v605
        %vm616 = vcmask 1042433
        %v617 = vsel %vm616, %v613, %v615
        %v618 = vrot.slane %v617, 1
        %v619 = vld [vmem:[%s411] sm:$0xff]
        %v620 = vld [vmem:[%s411 + $0x8] sm:$0xff]
        %v621 = vld [vmem:[%s411 + $0x10] sm:$0xff]
        %v622 = vld [vmem:[%s411 + $0x18] sm:$0xff]
        %v623 = vperm.slane %v611, 0
        %v624 = vperm.slane %v611, 1
        %v625 = vperm.slane %v618, 0
        %v626 = vperm.slane %v618, 1
        %v631 = vmul.f32 %v619, %v623
        %v632 = vmul.f32 %v620, %v624
        %v633 = vmul.f32 %v621, %v625
        %v634 = vmul.f32 %v622, %v626
        %635 = vst [vmem:[%s452] sm:$0xff] %v631
        %636 = vst [vmem:[%s452 + $0x8] sm:$0xff] %v632
        %637 = vst [vmem:[%s452 + $0x10] sm:$0xff] %v633
        %638 = vst [vmem:[%s452 + $0x18] sm:$0xff] %v634
        %s639 = sand.u32 %s217, 1
        %s640 = scalar_lea.sflag [#allocation5], %s639
        %s641 = sand.u32 %s217, 1
        %s642 = smul.addr %s641, 32
        %s643 = scalar_lea.vmem [#allocation14], %s642
        // Predicated region
        $region77: #{tpu_custom_call.1} parent=47 // pred_check
          %p644 = pneg %p227
        $region78: #{tpu_custom_call.1} parent=47 // pred_check_branch
          %646 = sbr.rel (%p644) target = $region80
        $region79: #{tpu_custom_call.1} parent=47 // pred_region
          %s647 = smul.u32 2, %s35
          %649 = vsyncadd %s640, 0
          %s650 = smul.addr %s36, 2
          %s651 = smul.addr %s647, 2
          %s652 = sadd.s32 %s650, %s651
          %s653 = smul.addr %s652, 8
          %s654 = scalar_lea.hbm %s7, %s653
          %s655 = sshll.u32 %s643, 4
          %s656 = int_to_ptr.vmem [resolvable:$true] %s655
          %s657 = sshll.u32 %s654, 4
          %s658 = int_to_ptr.hbm [resolvable:$true] %s657
          %663 = dma.vmem_to_hbm [thread:$0]  %s656, 512, %s658, %s640, 256, 256, 16
        $region80: #{tpu_custom_call.1} parent=47 // pred_fallthru
          _
      $region48: #{tpu_custom_call.1} parent=5 // pred_fallthru
        _
      %p664 = scmp.le.s32.totalorder 2, %s26
      // Predicated region
      $region81: #{tpu_custom_call.1} parent=5 // pred_check
        %p665 = pneg %p664
      $region82: #{tpu_custom_call.1} parent=5 // pred_check_branch
        %667 = sbr.rel (%p665) target = $region84
      $region83: #{tpu_custom_call.1} parent=5 // pred_region
        %s668 = ssub.s32 %s26, 2
        // Predicated region
        $region85: #{tpu_custom_call.1} parent=83 // pred_check
          %p669 = pneg %p233
        $region86: #{tpu_custom_call.1} parent=83 // pred_check_branch
          %671 = sbr.rel (%p669) target = $region88
        $region87: #{tpu_custom_call.1} parent=83 // pred_region
          %s672 = sand.u32 %s218, 1
          %s673 = scalar_lea.sflag [#allocation5], %s672
          %s674 = sand.u32 %s218, 1
          %s675 = smul.addr %s674, 32
          %s676 = scalar_lea.vmem [#allocation14], %s675
          %678 = dma.done %s673, 512
        $region88: #{tpu_custom_call.1} parent=83 // pred_fallthru
          _
      $region84: #{tpu_custom_call.1} parent=5 // pred_fallthru
        _
    $region6: #{tpu_custom_call.1} parent=1 // loop_footer
      %s30 = sadd.s32 1, %s26
    $region7: #{tpu_custom_call.1} parent=1 // loop_footer_branch
      %25 = sbr.rel target = $region3
    $region8: #{tpu_custom_call.1} parent=1 // loop_exit
      _
    %679 = vsyncpa [#allocation4], 1
    %s680 = scalar_lea.sflag [#allocation4], 1
    %681 = vsyncpa %s680, 1
    %682 = vsyncpa [#allocation7], 1
    %s683 = scalar_lea.sflag [#allocation7], 1
    %684 = vsyncpa %s683, 1
    %685 = vsyncpa [#allocation10], 1
    %686 = vsyncpa [#allocation13], 1
    %s687 = scalar_lea.sflag [#allocation13], 1
    %688 = vsyncpa %s687, 1
    %689 = vsyncpa [#allocation5], 1
    %s690 = scalar_lea.sflag [#allocation5], 1
    %691 = vsyncpa %s690, 1

</llo_original>
